<compile_context>
chip_gen: v7x
topology: tpu7x:2x2x1
jax: 0.10.0
libtpu: 0.0.40
codegen_flags: <defaults>
</compile_context>

<pallas_src>
import functools

import jax
import jax.numpy as jnp
from jax.experimental import pallas as pl
from jax.experimental.pallas import tpu as pltpu


def _layernorm(v, w, b, eps=1e-5):
    mu = jnp.mean(v, axis=-1, keepdims=True)
    var = jnp.mean((v - mu) ** 2, axis=-1, keepdims=True)
    return (v - mu) * jax.lax.rsqrt(var + eps) * w + b


def residual_attn_block_kernel(
    x_ref,                    # (1, S, D)   f32
    ln1_w_ref, ln1_b_ref,     # (1, D), (1, D)        f32
    w_qkv_ref, b_qkv_ref,     # (D, 3D) bf16, (1, 3D) f32   (in_proj, pre-transposed)
    w_out_ref, b_out_ref,     # (D, D)  bf16, (1, D)  f32   (out_proj, pre-transposed)
    ln2_w_ref, ln2_b_ref,     # (1, D), (1, D)        f32
    w_fc_ref, b_fc_ref,       # (D, 4D) bf16, (1, 4D) f32   (c_fc, pre-transposed)
    w_proj_ref, b_proj_ref,   # (4D, D) bf16, (1, D)  f32   (c_proj, pre-transposed)
    o_ref,                    # (1, S, D)
    *, n_head: int,
):
    x = x_ref[0].astype(jnp.float32)            # (S, D)
    S, D = x.shape
    dh = D // n_head
    scale = 1.0 / (dh ** 0.5)
    cdt = w_qkv_ref.dtype                       # bf16 compute dtype for MXU operands

    # --- attention branch -------------------------------------------------
    h = _layernorm(x, ln1_w_ref[0], ln1_b_ref[0]).astype(cdt)

    # qkv projection: (S, 3D) = h @ W_in_t + b_in   (weights already transposed)
    qkv = jnp.dot(h, w_qkv_ref[...], preferred_element_type=jnp.float32) + b_qkv_ref[0]

    q = qkv[:, 0 * D:1 * D] * scale             # fold 1/sqrt(dh) into q (S*dh, not S*S)
    k = qkv[:, 1 * D:2 * D]
    v = qkv[:, 2 * D:3 * D]

    # (S, D) -> (n_head, S, dh): one relayout per tensor instead of n_head slices.
    def to_heads(t):
        return jnp.transpose(t.reshape(S, n_head, dh), (1, 0, 2))

    qh = to_heads(q).astype(cdt)                # (H, S, dh)
    kh = to_heads(k).astype(cdt)                # (H, S, dh)
    vh = to_heads(v).astype(cdt)                # (H, S, dh)

    # Head-batched scaled dot-product attention (single MXU-batched dot_general).
    # TODO(synk): for long sequences add a query-tile grid axis + online softmax
    #             so the (H, S, S) score tensor never fully materializes in VMEM.
    scores = jnp.einsum("hqd,hkd->hqk", qh, kh,
                        preferred_element_type=jnp.float32)          # (H, S, S)
    scores = scores - jnp.max(scores, axis=-1, keepdims=True)
    p = jnp.exp(scores)
    p = p * pl.reciprocal(jnp.sum(p, axis=-1, keepdims=True), approx=True)

    ctx = jnp.einsum("hqk,hkd->hqd", p.astype(cdt), vh,
                     preferred_element_type=jnp.float32)             # (H, S, dh)
    ctx = jnp.transpose(ctx, (1, 0, 2)).reshape(S, D).astype(cdt)    # (S, D)

    attn = jnp.dot(ctx, w_out_ref[...], preferred_element_type=jnp.float32) + b_out_ref[0]
    x1 = x + attn

    # --- MLP branch ---------------------------------------------------------
    h2 = _layernorm(x1, ln2_w_ref[0], ln2_b_ref[0]).astype(cdt)
    fc = jnp.dot(h2, w_fc_ref[...], preferred_element_type=jnp.float32) + b_fc_ref[0]
    fc = fc * jax.nn.sigmoid(1.702 * fc)                             # QuickGELU
    proj = jnp.dot(fc.astype(cdt), w_proj_ref[...],
                   preferred_element_type=jnp.float32) + b_proj_ref[0]

    o_ref[0] = (x1 + proj).astype(o_ref.dtype)


def prepare_params(params, compute_dtype=jnp.bfloat16):
    """One-time conversion from PyTorch-layout params to kernel layout.

    Matmul weights are transposed (contraction dim first) and cast to bf16 so
    the kernel needs no in-kernel `.T`; LN params and biases stay f32 (added
    after f32 accumulation).
    """
    f32 = jnp.float32
    return {
        "ln1_w": params["ln1_w"].astype(f32),
        "ln1_b": params["ln1_b"].astype(f32),
        "w_qkv_t": params["w_qkv"].T.astype(compute_dtype),    # (D, 3D)
        "b_qkv": params["b_qkv"].astype(f32),                  # (1, 3D)
        "w_out_t": params["w_out"].T.astype(compute_dtype),    # (D, D)
        "b_out": params["b_out"].astype(f32),                  # (1, D)
        "ln2_w": params["ln2_w"].astype(f32),
        "ln2_b": params["ln2_b"].astype(f32),
        "w_fc_t": params["w_fc"].T.astype(compute_dtype),      # (D, 4D)
        "b_fc": params["b_fc"].astype(f32),                    # (1, 4D)
        "w_proj_t": params["w_proj"].T.astype(compute_dtype),  # (4D, D)
        "b_proj": params["b_proj"].astype(f32),                # (1, D)
    }


def _vmem_estimate_bytes(S, D, n_head, weight_bytes):
    # conservative: weights (assume double-buffered) + x/out blocks + activations
    weights = 12 * D * D * weight_bytes * 2
    biases = 16 * D * 4
    xio = 2 * 2 * S * D * 4
    acts = (S * 3 * D + 3 * S * D + S * 4 * D * 2 + S * D * 2) * 4 + n_head * S * S * 4 * 2
    return weights + biases + xio + acts + (4 << 20)


def residual_attention_block(x_bsd, prep, n_head):
    """x_bsd: (B, S, D) float32 (batch-first). Returns (B, S, D).

    Params must come from `prepare_params` (pre-transposed, bf16 weights).
    """
    B, S, D = x_bsd.shape
    wbytes = jnp.dtype(prep["w_qkv_t"].dtype).itemsize

    const2d = lambda shape: pl.BlockSpec(shape, lambda b: (0, 0))
    kernel = functools.partial(residual_attn_block_kernel, n_head=n_head)

    # Raise the scoped VMEM limit for real CLIP sizes; clamps to default-ish 32 MiB
    # at small shapes so it is a no-op there.
    vmem_limit = int(min(max(_vmem_estimate_bytes(S, D, n_head, wbytes), 32 << 20),
                         100 << 20))

    # TODO(synk): for D>=1024 on v7x (64 MiB VMEM), single-buffer the constant-index
    #             weight BlockSpecs (pipeline_mode=pl.Buffered(1)) or stream the MLP
    #             weights over an extra grid axis instead of keeping them resident.
    out_bsd = pl.pallas_call(
        kernel,
        out_shape=jax.ShapeDtypeStruct((B, S, D), x_bsd.dtype),
        grid_spec=pltpu.PrefetchScalarGridSpec(
            num_scalar_prefetch=0,
            grid=(B,),
            in_specs=[
                pl.BlockSpec((1, S, D), lambda b: (b, 0, 0)),   # x
                const2d((1, D)), const2d((1, D)),               # ln1 w, b
                const2d((D, 3 * D)), const2d((1, 3 * D)),       # in_proj w^T, b
                const2d((D, D)), const2d((1, D)),               # out_proj w^T, b
                const2d((1, D)), const2d((1, D)),               # ln2 w, b
                const2d((D, 4 * D)), const2d((1, 4 * D)),       # c_fc w^T, b
                const2d((4 * D, D)), const2d((1, D)),           # c_proj w^T, b
            ],
            out_specs=pl.BlockSpec((1, S, D), lambda b: (b, 0, 0)),
        ),
        compiler_params=pltpu.CompilerParams(
            dimension_semantics=("parallel",),      # shard batch across v7x's 2 TCs
            vmem_limit_bytes=vmem_limit,
        ),
    )(
        x_bsd,
        prep["ln1_w"], prep["ln1_b"],
        prep["w_qkv_t"], prep["b_qkv"],
        prep["w_out_t"], prep["b_out"],
        prep["ln2_w"], prep["ln2_b"],
        prep["w_fc_t"], prep["b_fc"],
        prep["w_proj_t"], prep["b_proj"],
    )
    return out_bsd


def make_params(key, d_model):
    """Deterministic synthetic parameters matching the PyTorch module shapes."""
    ks = jax.random.split(key, 12)
    D = d_model
    std = 0.02
    return {
        "ln1_w": jnp.ones((1, D), jnp.float32) + 0.01 * jax.random.normal(ks[0], (1, D)),
        "ln1_b": 0.01 * jax.random.normal(ks[1], (1, D)),
        "ln2_w": jnp.ones((1, D), jnp.float32) + 0.01 * jax.random.normal(ks[2], (1, D)),
        "ln2_b": 0.01 * jax.random.normal(ks[3], (1, D)),
        # nn.MultiheadAttention (PyTorch layout: in_proj (3D, D), out_proj (D, D))
        "w_qkv": std * jax.random.normal(ks[4], (3 * D, D), jnp.float32),
        "b_qkv": std * jax.random.normal(ks[5], (1, 3 * D), jnp.float32),
        "w_out": std * jax.random.normal(ks[6], (D, D), jnp.float32),
        "b_out": std * jax.random.normal(ks[7], (1, D), jnp.float32),
        # MLP (PyTorch layout: c_fc (4D, D), c_proj (D, 4D))
        "w_fc": std * jax.random.normal(ks[8], (4 * D, D), jnp.float32),
        "b_fc": std * jax.random.normal(ks[9], (1, 4 * D), jnp.float32),
        "w_proj": std * jax.random.normal(ks[10], (D, 4 * D), jnp.float32),
        "b_proj": std * jax.random.normal(ks[11], (1, D), jnp.float32),
    }


def reference_block(x_sbd, params, n_head):
    """Pure-JAX f32 reference of the PyTorch forward (seq-first, like nn.MHA)."""
    S, B, D = x_sbd.shape
    dh = D // n_head

    def ln(v, w, b):
        mu = jnp.mean(v, -1, keepdims=True)
        var = jnp.mean((v - mu) ** 2, -1, keepdims=True)
        return (v - mu) / jnp.sqrt(var + 1e-5) * w[0] + b[0]

    h = ln(x_sbd, params["ln1_w"], params["ln1_b"])
    qkv = jnp.einsum("sbd,ed->sbe", h, params["w_qkv"]) + params["b_qkv"][0]
    q, k, v = jnp.split(qkv, 3, axis=-1)
    q = q.reshape(S, B, n_head, dh)
    k = k.reshape(S, B, n_head, dh)
    v = v.reshape(S, B, n_head, dh)
    scores = jnp.einsum("qbhd,kbhd->bhqk", q, k) / jnp.sqrt(dh)
    p = jax.nn.softmax(scores, axis=-1)
    a = jnp.einsum("bhqk,kbhd->qbhd", p, v).reshape(S, B, D)
    a = jnp.einsum("sbd,ed->sbe", a, params["w_out"]) + params["b_out"][0]
    x1 = x_sbd + a
    h2 = ln(x1, params["ln2_w"], params["ln2_b"])
    fc = jnp.einsum("sbd,ed->sbe", h2, params["w_fc"]) + params["b_fc"][0]
    fc = fc * jax.nn.sigmoid(1.702 * fc)
    pr = jnp.einsum("sbe,de->sbd", fc, params["w_proj"]) + params["b_proj"][0]
    return x1 + pr


if __name__ == "__main__":
    SEQ, BATCH, D_MODEL, N_HEAD = 8, 2, 32, 4

    key = jax.random.PRNGKey(0)
    kx, kp = jax.random.split(key)
    # PyTorch module is seq-first (S, B, D); the kernel wrapper is batch-first.
    x_sbd = jax.random.normal(kx, (SEQ, BATCH, D_MODEL), jnp.float32)
    params = make_params(kp, D_MODEL)
    prep = prepare_params(params)

    x_bsd = jnp.transpose(x_sbd, (1, 0, 2))          # layout change outside the kernel
    out_bsd = residual_attention_block(x_bsd, prep, N_HEAD)
    out_bsd = jax.block_until_ready(out_bsd)
    out_sbd = jnp.transpose(out_bsd, (1, 0, 2))

    ref = reference_block(x_sbd, params, N_HEAD)
    assert out_sbd.shape == (SEQ, BATCH, D_MODEL)
    # bf16 MXU operands with f32 accumulation -> looser tolerance vs f32 reference.
    err = float(jnp.max(jnp.abs(out_sbd - ref)))
    assert jnp.allclose(out_sbd, ref, atol=2e-2, rtol=2e-2), err

    print("KERNEL_OK")
</pallas_src>

<mosaic_0001>
module attributes {stable_mosaic.version = 11 : i64} {
  func.func @residual_attn_block_kernel(%arg0: i32, %arg1: memref<1x8x32xf32, #tpu.memory_space<vmem>>, %arg2: memref<1x32xf32, #tpu.memory_space<vmem>>, %arg3: memref<1x32xf32, #tpu.memory_space<vmem>>, %arg4: memref<32x96xbf16, #tpu.memory_space<vmem>>, %arg5: memref<1x96xf32, #tpu.memory_space<vmem>>, %arg6: memref<32x32xbf16, #tpu.memory_space<vmem>>, %arg7: memref<1x32xf32, #tpu.memory_space<vmem>>, %arg8: memref<1x32xf32, #tpu.memory_space<vmem>>, %arg9: memref<1x32xf32, #tpu.memory_space<vmem>>, %arg10: memref<32x128xbf16, #tpu.memory_space<vmem>>, %arg11: memref<1x128xf32, #tpu.memory_space<vmem>>, %arg12: memref<128x32xbf16, #tpu.memory_space<vmem>>, %arg13: memref<1x32xf32, #tpu.memory_space<vmem>>, %arg14: memref<1x8x32xf32, #tpu.memory_space<vmem>>) attributes {dimension_semantics = [#tpu.dimension_semantics<parallel>], iteration_bounds = array<i64: 2>, scalar_prefetch = 0 : i64, scratch_operands = 0 : i64, tpu.core_type = #tpu.core_type<tc>, window_params = [{transform_indices = @transform_0, window_bounds = array<i64: 1, 8, 32>}, {pipeline_mode = #tpu.pipeline_mode<synchronous>, transform_indices = @transform_1, window_bounds = array<i64: 1, 32>}, {pipeline_mode = #tpu.pipeline_mode<synchronous>, transform_indices = @transform_2, window_bounds = array<i64: 1, 32>}, {pipeline_mode = #tpu.pipeline_mode<synchronous>, transform_indices = @transform_3, window_bounds = array<i64: 32, 96>}, {pipeline_mode = #tpu.pipeline_mode<synchronous>, transform_indices = @transform_4, window_bounds = array<i64: 1, 96>}, {pipeline_mode = #tpu.pipeline_mode<synchronous>, transform_indices = @transform_5, window_bounds = array<i64: 32, 32>}, {pipeline_mode = #tpu.pipeline_mode<synchronous>, transform_indices = @transform_6, window_bounds = array<i64: 1, 32>}, {pipeline_mode = #tpu.pipeline_mode<synchronous>, transform_indices = @transform_7, window_bounds = array<i64: 1, 32>}, {pipeline_mode = #tpu.pipeline_mode<synchronous>, transform_indices = @transform_8, window_bounds = array<i64: 1, 32>}, {pipeline_mode = #tpu.pipeline_mode<synchronous>, transform_indices = @transform_9, window_bounds = array<i64: 32, 128>}, {pipeline_mode = #tpu.pipeline_mode<synchronous>, transform_indices = @transform_10, window_bounds = array<i64: 1, 128>}, {pipeline_mode = #tpu.pipeline_mode<synchronous>, transform_indices = @transform_11, window_bounds = array<i64: 128, 32>}, {pipeline_mode = #tpu.pipeline_mode<synchronous>, transform_indices = @transform_12, window_bounds = array<i64: 1, 32>}, {transform_indices = @transform_13, window_bounds = array<i64: 1, 8, 32>}]} {
    %c0 = arith.constant 0 : index
    %c0_0 = arith.constant 0 : index
    %c0_1 = arith.constant 0 : index
    %0 = vector.load %arg1[%c0, %c0_0, %c0_1] : memref<1x8x32xf32, #tpu.memory_space<vmem>>, vector<1x8x32xf32>
    %1 = vector.shape_cast %0 : vector<1x8x32xf32> to vector<8x32xf32>
    %c0_2 = arith.constant 0 : index
    %c0_3 = arith.constant 0 : index
    %2 = vector.load %arg2[%c0_2, %c0_3] : memref<1x32xf32, #tpu.memory_space<vmem>>, vector<1x32xf32>
    %3 = vector.shape_cast %2 : vector<1x32xf32> to vector<32xf32>
    %c0_4 = arith.constant 0 : index
    %c0_5 = arith.constant 0 : index
    %4 = vector.load %arg3[%c0_4, %c0_5] : memref<1x32xf32, #tpu.memory_space<vmem>>, vector<1x32xf32>
    %5 = vector.shape_cast %4 : vector<1x32xf32> to vector<32xf32>
    %cst = arith.constant dense<0.000000e+00> : vector<8xf32>
    %6 = vector.multi_reduction <add>, %1, %cst [1] : vector<8x32xf32> to vector<8xf32>
    %7 = vector.shape_cast %6 : vector<8xf32> to vector<8x1xf32>
    %cst_6 = arith.constant 3.200000e+01 : f32
    %8 = vector.broadcast %cst_6 : f32 to vector<8x1xf32>
    %9 = arith.divf %7, %8 : vector<8x1xf32>
    %10 = vector.broadcast %9 : vector<8x1xf32> to vector<8x32xf32>
    %11 = arith.subf %1, %10 : vector<8x32xf32>
    %12 = arith.mulf %11, %11 : vector<8x32xf32>
    %cst_7 = arith.constant dense<0.000000e+00> : vector<8xf32>
    %13 = vector.multi_reduction <add>, %12, %cst_7 [1] : vector<8x32xf32> to vector<8xf32>
    %14 = vector.shape_cast %13 : vector<8xf32> to vector<8x1xf32>
    %cst_8 = arith.constant 3.200000e+01 : f32
    %15 = vector.broadcast %cst_8 : f32 to vector<8x1xf32>
    %16 = arith.divf %14, %15 : vector<8x1xf32>
    %17 = vector.broadcast %9 : vector<8x1xf32> to vector<8x32xf32>
    %18 = arith.subf %1, %17 : vector<8x32xf32>
    %cst_9 = arith.constant 9.99999974E-6 : f32
    %19 = vector.broadcast %cst_9 : f32 to vector<8x1xf32>
    %20 = arith.addf %16, %19 : vector<8x1xf32>
    %21 = math.rsqrt %20 : vector<8x1xf32>
    %22 = vector.broadcast %21 : vector<8x1xf32> to vector<8x32xf32>
    %23 = arith.mulf %18, %22 : vector<8x32xf32>
    %24 = vector.shape_cast %3 : vector<32xf32> to vector<1x32xf32>
    %25 = vector.broadcast %24 : vector<1x32xf32> to vector<8x32xf32>
    %26 = arith.mulf %23, %25 : vector<8x32xf32>
    %27 = vector.shape_cast %5 : vector<32xf32> to vector<1x32xf32>
    %28 = vector.broadcast %27 : vector<1x32xf32> to vector<8x32xf32>
    %29 = arith.addf %26, %28 : vector<8x32xf32>
    %30 = arith.truncf %29 : vector<8x32xf32> to vector<8x32xbf16>
    %c0_10 = arith.constant 0 : index
    %c0_11 = arith.constant 0 : index
    %31 = vector.load %arg4[%c0_10, %c0_11] : memref<32x96xbf16, #tpu.memory_space<vmem>>, vector<32x96xbf16>
    %cst_12 = arith.constant dense<0.000000e+00> : vector<8x96xf32>
    %32 = tpu.matmul %30, %31, %cst_12 {dimension_numbers = #tpu.dot_dimension_numbers<[1], [0], [0], [1], [0, 0, 1, 1], [], []>} : vector<8x32xbf16>, vector<32x96xbf16>, vector<8x96xf32> -> vector<8x96xf32>
    %c0_13 = arith.constant 0 : index
    %c0_14 = arith.constant 0 : index
    %33 = vector.load %arg5[%c0_13, %c0_14] : memref<1x96xf32, #tpu.memory_space<vmem>>, vector<1x96xf32>
    %34 = vector.shape_cast %33 : vector<1x96xf32> to vector<96xf32>
    %35 = vector.shape_cast %34 : vector<96xf32> to vector<1x96xf32>
    %36 = vector.broadcast %35 : vector<1x96xf32> to vector<8x96xf32>
    %37 = arith.addf %32, %36 : vector<8x96xf32>
    %38 = vector.extract_strided_slice %37 {offsets = [0, 0], sizes = [8, 32], strides = [1, 1]} : vector<8x96xf32> to vector<8x32xf32>
    %cst_15 = arith.constant 0.353553385 : f32
    %39 = vector.broadcast %cst_15 : f32 to vector<8x32xf32>
    %40 = arith.mulf %38, %39 : vector<8x32xf32>
    %41 = vector.extract_strided_slice %37 {offsets = [0, 32], sizes = [8, 32], strides = [1, 1]} : vector<8x96xf32> to vector<8x32xf32>
    %42 = vector.extract_strided_slice %37 {offsets = [0, 64], sizes = [8, 32], strides = [1, 1]} : vector<8x96xf32> to vector<8x32xf32>
    %43 = vector.shape_cast %40 : vector<8x32xf32> to vector<8x4x8xf32>
    %44 = tpu.transpose %43, [1, 0, 2] : vector<8x4x8xf32> -> vector<4x8x8xf32>
    %45 = arith.truncf %44 : vector<4x8x8xf32> to vector<4x8x8xbf16>
    %46 = vector.shape_cast %41 : vector<8x32xf32> to vector<8x4x8xf32>
    %47 = tpu.transpose %46, [1, 0, 2] : vector<8x4x8xf32> -> vector<4x8x8xf32>
    %48 = arith.truncf %47 : vector<4x8x8xf32> to vector<4x8x8xbf16>
    %49 = vector.shape_cast %42 : vector<8x32xf32> to vector<8x4x8xf32>
    %50 = tpu.transpose %49, [1, 0, 2] : vector<8x4x8xf32> -> vector<4x8x8xf32>
    %51 = arith.truncf %50 : vector<4x8x8xf32> to vector<4x8x8xbf16>
    "tpu.trace_start"() <{level = 10 : i32, message = "hqd,hkd->hqk"}> : () -> ()
    %cst_16 = arith.constant dense<0.000000e+00> : vector<4x8x8xf32>
    %52 = tpu.matmul %45, %48, %cst_16 {dimension_numbers = #tpu.dot_dimension_numbers<[2], [2], [1], [1], [0, 0, 0, 1, 1, 1], [0], [0]>} : vector<4x8x8xbf16>, vector<4x8x8xbf16>, vector<4x8x8xf32> -> vector<4x8x8xf32>
    "tpu.trace_stop"() : () -> ()
    %cst_17 = arith.constant dense<0xFF800000> : vector<4x8xf32>
    %53 = vector.multi_reduction <maximumf>, %52, %cst_17 [2] : vector<4x8x8xf32> to vector<4x8xf32>
    %54 = vector.shape_cast %53 : vector<4x8xf32> to vector<4x8x1xf32>
    %55 = vector.broadcast %54 : vector<4x8x1xf32> to vector<4x8x8xf32>
    %56 = arith.subf %52, %55 : vector<4x8x8xf32>
    %57 = math.exp %56 : vector<4x8x8xf32>
    %cst_18 = arith.constant dense<0.000000e+00> : vector<4x8xf32>
    %58 = vector.multi_reduction <add>, %57, %cst_18 [2] : vector<4x8x8xf32> to vector<4x8xf32>
    %59 = vector.shape_cast %58 : vector<4x8xf32> to vector<4x8x1xf32>
    %60 = tpu.reciprocal %59 {approx = true} : vector<4x8x1xf32> -> vector<4x8x1xf32>
    %61 = vector.broadcast %60 : vector<4x8x1xf32> to vector<4x8x8xf32>
    %62 = arith.mulf %57, %61 : vector<4x8x8xf32>
    %63 = arith.truncf %62 : vector<4x8x8xf32> to vector<4x8x8xbf16>
    "tpu.trace_start"() <{level = 10 : i32, message = "hqk,hkd->hqd"}> : () -> ()
    %cst_19 = arith.constant dense<0.000000e+00> : vector<4x8x8xf32>
    %64 = tpu.matmul %63, %51, %cst_19 {dimension_numbers = #tpu.dot_dimension_numbers<[2], [1], [1], [2], [0, 0, 0, 1, 1, 2], [0], [0]>} : vector<4x8x8xbf16>, vector<4x8x8xbf16>, vector<4x8x8xf32> -> vector<4x8x8xf32>
    "tpu.trace_stop"() : () -> ()
    %65 = tpu.transpose %64, [1, 0, 2] : vector<4x8x8xf32> -> vector<8x4x8xf32>
    %66 = vector.shape_cast %65 : vector<8x4x8xf32> to vector<8x32xf32>
    %67 = arith.truncf %66 : vector<8x32xf32> to vector<8x32xbf16>
    %c0_20 = arith.constant 0 : index
    %c0_21 = arith.constant 0 : index
    %68 = vector.load %arg6[%c0_20, %c0_21] : memref<32x32xbf16, #tpu.memory_space<vmem>>, vector<32x32xbf16>
    %cst_22 = arith.constant dense<0.000000e+00> : vector<8x32xf32>
    %69 = tpu.matmul %67, %68, %cst_22 {dimension_numbers = #tpu.dot_dimension_numbers<[1], [0], [0], [1], [0, 0, 1, 1], [], []>} : vector<8x32xbf16>, vector<32x32xbf16>, vector<8x32xf32> -> vector<8x32xf32>
    %c0_23 = arith.constant 0 : index
    %c0_24 = arith.constant 0 : index
    %70 = vector.load %arg7[%c0_23, %c0_24] : memref<1x32xf32, #tpu.memory_space<vmem>>, vector<1x32xf32>
    %71 = vector.shape_cast %70 : vector<1x32xf32> to vector<32xf32>
    %72 = vector.shape_cast %71 : vector<32xf32> to vector<1x32xf32>
    %73 = vector.broadcast %72 : vector<1x32xf32> to vector<8x32xf32>
    %74 = arith.addf %69, %73 : vector<8x32xf32>
    %75 = arith.addf %1, %74 : vector<8x32xf32>
    %c0_25 = arith.constant 0 : index
    %c0_26 = arith.constant 0 : index
    %76 = vector.load %arg8[%c0_25, %c0_26] : memref<1x32xf32, #tpu.memory_space<vmem>>, vector<1x32xf32>
    %77 = vector.shape_cast %76 : vector<1x32xf32> to vector<32xf32>
    %c0_27 = arith.constant 0 : index
    %c0_28 = arith.constant 0 : index
    %78 = vector.load %arg9[%c0_27, %c0_28] : memref<1x32xf32, #tpu.memory_space<vmem>>, vector<1x32xf32>
    %79 = vector.shape_cast %78 : vector<1x32xf32> to vector<32xf32>
    %cst_29 = arith.constant dense<0.000000e+00> : vector<8xf32>
    %80 = vector.multi_reduction <add>, %75, %cst_29 [1] : vector<8x32xf32> to vector<8xf32>
    %81 = vector.shape_cast %80 : vector<8xf32> to vector<8x1xf32>
    %cst_30 = arith.constant 3.200000e+01 : f32
    %82 = vector.broadcast %cst_30 : f32 to vector<8x1xf32>
    %83 = arith.divf %81, %82 : vector<8x1xf32>
    %84 = vector.broadcast %83 : vector<8x1xf32> to vector<8x32xf32>
    %85 = arith.subf %75, %84 : vector<8x32xf32>
    %86 = arith.mulf %85, %85 : vector<8x32xf32>
    %cst_31 = arith.constant dense<0.000000e+00> : vector<8xf32>
    %87 = vector.multi_reduction <add>, %86, %cst_31 [1] : vector<8x32xf32> to vector<8xf32>
    %88 = vector.shape_cast %87 : vector<8xf32> to vector<8x1xf32>
    %cst_32 = arith.constant 3.200000e+01 : f32
    %89 = vector.broadcast %cst_32 : f32 to vector<8x1xf32>
    %90 = arith.divf %88, %89 : vector<8x1xf32>
    %91 = vector.broadcast %83 : vector<8x1xf32> to vector<8x32xf32>
    %92 = arith.subf %75, %91 : vector<8x32xf32>
    %cst_33 = arith.constant 9.99999974E-6 : f32
    %93 = vector.broadcast %cst_33 : f32 to vector<8x1xf32>
    %94 = arith.addf %90, %93 : vector<8x1xf32>
    %95 = math.rsqrt %94 : vector<8x1xf32>
    %96 = vector.broadcast %95 : vector<8x1xf32> to vector<8x32xf32>
    %97 = arith.mulf %92, %96 : vector<8x32xf32>
    %98 = vector.shape_cast %77 : vector<32xf32> to vector<1x32xf32>
    %99 = vector.broadcast %98 : vector<1x32xf32> to vector<8x32xf32>
    %100 = arith.mulf %97, %99 : vector<8x32xf32>
    %101 = vector.shape_cast %79 : vector<32xf32> to vector<1x32xf32>
    %102 = vector.broadcast %101 : vector<1x32xf32> to vector<8x32xf32>
    %103 = arith.addf %100, %102 : vector<8x32xf32>
    %104 = arith.truncf %103 : vector<8x32xf32> to vector<8x32xbf16>
    %c0_34 = arith.constant 0 : index
    %c0_35 = arith.constant 0 : index
    %105 = vector.load %arg10[%c0_34, %c0_35] : memref<32x128xbf16, #tpu.memory_space<vmem>>, vector<32x128xbf16>
    %cst_36 = arith.constant dense<0.000000e+00> : vector<8x128xf32>
    %106 = tpu.matmul %104, %105, %cst_36 {dimension_numbers = #tpu.dot_dimension_numbers<[1], [0], [0], [1], [0, 0, 1, 1], [], []>} : vector<8x32xbf16>, vector<32x128xbf16>, vector<8x128xf32> -> vector<8x128xf32>
    %c0_37 = arith.constant 0 : index
    %c0_38 = arith.constant 0 : index
    %107 = vector.load %arg11[%c0_37, %c0_38] : memref<1x128xf32, #tpu.memory_space<vmem>>, vector<1x128xf32>
    %108 = vector.shape_cast %107 : vector<1x128xf32> to vector<128xf32>
    %109 = vector.shape_cast %108 : vector<128xf32> to vector<1x128xf32>
    %110 = vector.broadcast %109 : vector<1x128xf32> to vector<8x128xf32>
    %111 = arith.addf %106, %110 : vector<8x128xf32>
    %cst_39 = arith.constant 1.702000e+00 : f32
    %112 = vector.broadcast %cst_39 : f32 to vector<8x128xf32>
    %113 = arith.mulf %112, %111 : vector<8x128xf32>
    %114 = arith.negf %113 : vector<8x128xf32>
    %115 = math.exp %114 : vector<8x128xf32>
    %cst_40 = arith.constant 1.000000e+00 : f32
    %116 = vector.broadcast %cst_40 : f32 to vector<8x128xf32>
    %117 = arith.addf %116, %115 : vector<8x128xf32>
    %118 = arith.divf %116, %117 : vector<8x128xf32>
    %119 = arith.mulf %111, %118 : vector<8x128xf32>
    %120 = arith.truncf %119 : vector<8x128xf32> to vector<8x128xbf16>
    %c0_41 = arith.constant 0 : index
    %c0_42 = arith.constant 0 : index
    %121 = vector.load %arg12[%c0_41, %c0_42] : memref<128x32xbf16, #tpu.memory_space<vmem>>, vector<128x32xbf16>
    %cst_43 = arith.constant dense<0.000000e+00> : vector<8x32xf32>
    %122 = tpu.matmul %120, %121, %cst_43 {dimension_numbers = #tpu.dot_dimension_numbers<[1], [0], [0], [1], [0, 0, 1, 1], [], []>} : vector<8x128xbf16>, vector<128x32xbf16>, vector<8x32xf32> -> vector<8x32xf32>
    %c0_44 = arith.constant 0 : index
    %c0_45 = arith.constant 0 : index
    %123 = vector.load %arg13[%c0_44, %c0_45] : memref<1x32xf32, #tpu.memory_space<vmem>>, vector<1x32xf32>
    %124 = vector.shape_cast %123 : vector<1x32xf32> to vector<32xf32>
    %125 = vector.shape_cast %124 : vector<32xf32> to vector<1x32xf32>
    %126 = vector.broadcast %125 : vector<1x32xf32> to vector<8x32xf32>
    %127 = arith.addf %122, %126 : vector<8x32xf32>
    %128 = arith.addf %75, %127 : vector<8x32xf32>
    %c0_46 = arith.constant 0 : index
    %c0_47 = arith.constant 0 : index
    %c0_48 = arith.constant 0 : index
    %129 = vector.load %arg14[%c0_46, %c0_47, %c0_48] : memref<1x8x32xf32, #tpu.memory_space<vmem>>, vector<1x8x32xf32>
    %130 = vector.shape_cast %129 : vector<1x8x32xf32> to vector<8x32xf32>
    %131 = vector.shape_cast %128 : vector<8x32xf32> to vector<1x8x32xf32>
    tpu.vector_store %arg14[%c0_46, %c0_47, %c0_48], %131 {strides = array<i32>} : memref<1x8x32xf32, #tpu.memory_space<vmem>>, vector<1x8x32xf32>,
    return
  }
  func.func @transform_0(%arg0: i32) -> (i32, i32, i32) {
    %c0_i32 = arith.constant 0 : i32
    %c0_i32_0 = arith.constant 0 : i32
    %c0_i32_1 = arith.constant 0 : i32
    return %arg0, %c0_i32, %c0_i32_0 : i32, i32, i32
  }
  func.func @transform_1(%arg0: i32) -> (i32, i32) {
    %c0_i32 = arith.constant 0 : i32
    %c0_i32_0 = arith.constant 0 : i32
    %c0_i32_1 = arith.constant 0 : i32
    return %c0_i32, %c0_i32_0 : i32, i32
  }
  func.func @transform_2(%arg0: i32) -> (i32, i32) {
    %c0_i32 = arith.constant 0 : i32
    %c0_i32_0 = arith.constant 0 : i32
    %c0_i32_1 = arith.constant 0 : i32
    return %c0_i32, %c0_i32_0 : i32, i32
  }
  func.func @transform_3(%arg0: i32) -> (i32, i32) {
    %c0_i32 = arith.constant 0 : i32
    %c0_i32_0 = arith.constant 0 : i32
    %c0_i32_1 = arith.constant 0 : i32
    return %c0_i32, %c0_i32_0 : i32, i32
  }
  func.func @transform_4(%arg0: i32) -> (i32, i32) {
    %c0_i32 = arith.constant 0 : i32
    %c0_i32_0 = arith.constant 0 : i32
    %c0_i32_1 = arith.constant 0 : i32
    return %c0_i32, %c0_i32_0 : i32, i32
  }
  func.func @transform_5(%arg0: i32) -> (i32, i32) {
    %c0_i32 = arith.constant 0 : i32
    %c0_i32_0 = arith.constant 0 : i32
    %c0_i32_1 = arith.constant 0 : i32
    return %c0_i32, %c0_i32_0 : i32, i32
  }
  func.func @transform_6(%arg0: i32) -> (i32, i32) {
    %c0_i32 = arith.constant 0 : i32
    %c0_i32_0 = arith.constant 0 : i32
    %c0_i32_1 = arith.constant 0 : i32
    return %c0_i32, %c0_i32_0 : i32, i32
  }
  func.func @transform_7(%arg0: i32) -> (i32, i32) {
    %c0_i32 = arith.constant 0 : i32
    %c0_i32_0 = arith.constant 0 : i32
    %c0_i32_1 = arith.constant 0 : i32
    return %c0_i32, %c0_i32_0 : i32, i32
  }
  func.func @transform_8(%arg0: i32) -> (i32, i32) {
    %c0_i32 = arith.constant 0 : i32
    %c0_i32_0 = arith.constant 0 : i32
    %c0_i32_1 = arith.constant 0 : i32
    return %c0_i32, %c0_i32_0 : i32, i32
  }
  func.func @transform_9(%arg0: i32) -> (i32, i32) {
    %c0_i32 = arith.constant 0 : i32
    %c0_i32_0 = arith.constant 0 : i32
    %c0_i32_1 = arith.constant 0 : i32
    return %c0_i32, %c0_i32_0 : i32, i32
  }
  func.func @transform_10(%arg0: i32) -> (i32, i32) {
    %c0_i32 = arith.constant 0 : i32
    %c0_i32_0 = arith.constant 0 : i32
    %c0_i32_1 = arith.constant 0 : i32
    return %c0_i32, %c0_i32_0 : i32, i32
  }
  func.func @transform_11(%arg0: i32) -> (i32, i32) {
    %c0_i32 = arith.constant 0 : i32
    %c0_i32_0 = arith.constant 0 : i32
    %c0_i32_1 = arith.constant 0 : i32
    return %c0_i32, %c0_i32_0 : i32, i32
  }
  func.func @transform_12(%arg0: i32) -> (i32, i32) {
    %c0_i32 = arith.constant 0 : i32
    %c0_i32_0 = arith.constant 0 : i32
    %c0_i32_1 = arith.constant 0 : i32
    return %c0_i32, %c0_i32_0 : i32, i32
  }
  func.func @transform_13(%arg0: i32) -> (i32, i32, i32) {
    %c0_i32 = arith.constant 0 : i32
    %c0_i32_0 = arith.constant 0 : i32
    %c0_i32_1 = arith.constant 0 : i32
    return %arg0, %c0_i32, %c0_i32_0 : i32, i32, i32
  }
}

</mosaic_0001>

<llo_original>
// kernel: tpu_custom_call.1
$region0: #{tpu_custom_call.1}
  #allocation0 [shape = 'u32[]', space=smem, size = 0x4, offset = 0x4, fixed_abs, tag = 'smem constant byte address 0x4 - core index']
  #allocation1 [shape = 'u32[144,128]{1,0:T(1,128)}', space=vmem, size = 0x12000, scoped, tag = 'internal scratch']
  %s0 = inlined_call_operand.vmem [shape: f32[2,8,32], index: 0, kind: input, shape index: {}]
  %s1 = inlined_call_operand.vmem [shape: f32[1,32], index: 1, kind: input, shape index: {}]
  %s2 = inlined_call_operand.vmem [shape: f32[1,32], index: 2, kind: input, shape index: {}]
  %s3 = inlined_call_operand.vmem [shape: bf16[32,96], index: 3, kind: input, shape index: {}]
  %s4 = inlined_call_operand.vmem [shape: f32[1,96], index: 4, kind: input, shape index: {}]
  %s5 = inlined_call_operand.vmem [shape: bf16[32,32], index: 5, kind: input, shape index: {}]
  %s6 = inlined_call_operand.vmem [shape: f32[1,32], index: 6, kind: input, shape index: {}]
  %s7 = inlined_call_operand.vmem [shape: f32[1,32], index: 7, kind: input, shape index: {}]
  %s8 = inlined_call_operand.vmem [shape: f32[1,32], index: 8, kind: input, shape index: {}]
  %s9 = inlined_call_operand.vmem [shape: bf16[32,128], index: 9, kind: input, shape index: {}]
  %s10 = inlined_call_operand.vmem [shape: f32[1,128], index: 10, kind: input, shape index: {}]
  %s11 = inlined_call_operand.vmem [shape: bf16[128,32], index: 11, kind: input, shape index: {}]
  %s12 = inlined_call_operand.vmem [shape: f32[1,32], index: 12, kind: input, shape index: {}]
  %s13 = inlined_call_operand.hbm [shape: f32[2,8,32], index: 13, kind: output, shape index: {}]
  %s14 = sld [smem:[#allocation0]]
  $region85: #{tpu_custom_call.1} parent=0
    _
  %s16 = ssub.s32 1, %s14
  %s17 = scalar_select 0, %s16, %s14
  $region1: #{tpu_custom_call.1} parent=0
    #allocation2 [shape = 'u8[8192]{0}', space=vmem, size = 0x2000, scoped, tag = 'output window, operand 0']
    #allocation3 [shape = 's32[2]{0}', space=sflag, size = 0x8, scoped, tag = 'scoped memory for tpu_custom_call.1']
    %18 = vsyncpa [#allocation3], 0
    %s19 = scalar_lea.sflag [#allocation3], 1
    %20 = vsyncpa %s19, 0
    loop: start=0, step=1, limit=4
    $region2: #{tpu_custom_call.1} parent=1 // loop_pre_header
      _
    $region3: #{tpu_custom_call.1} parent=1 // loop_header
      %s22 = sphi 0, %s26
      %p23 = scmp.ge.s32.totalorder %s22, 4
      %s32 = sphi 0, %s34
      %s35 = sphi 0, %s32
      %s36 = sphi 0, %s35
      %s52 = sphi 0, %s36
      %s56 = sphi 0, %s56
      %s58 = sphi 0, %s56
      %s59 = sphi 0, %s58
      %s73 = sphi 0, %s59
      %s77 = sphi 0, %s77
      %s79 = sphi 0, %s77
      %s80 = sphi 0, %s79
      %s94 = sphi 0, %s80
      %s98 = sphi 0, %s98
      %s100 = sphi 0, %s98
      %s101 = sphi 0, %s100
      %s115 = sphi 0, %s101
      %s119 = sphi 0, %s119
      %s121 = sphi 0, %s119
      %s122 = sphi 0, %s121
      %s136 = sphi 0, %s122
      %s140 = sphi 0, %s140
      %s142 = sphi 0, %s140
      %s143 = sphi 0, %s142
      %s157 = sphi 0, %s143
      %s161 = sphi 0, %s161
      %s163 = sphi 0, %s161
      %s164 = sphi 0, %s163
      %s178 = sphi 0, %s164
      %s182 = sphi 0, %s182
      %s184 = sphi 0, %s182
      %s185 = sphi 0, %s184
      %s199 = sphi 0, %s185
      %s203 = sphi 0, %s203
      %s205 = sphi 0, %s203
      %s206 = sphi 0, %s205
      %s220 = sphi 0, %s206
      %s224 = sphi 0, %s224
      %s226 = sphi 0, %s224
      %s227 = sphi 0, %s226
      %s241 = sphi 0, %s227
      %s245 = sphi 0, %s245
      %s247 = sphi 0, %s245
      %s248 = sphi 0, %s247
      %s262 = sphi 0, %s248
      %s266 = sphi 0, %s266
      %s268 = sphi 0, %s266
      %s269 = sphi 0, %s268
      %s283 = sphi 0, %s269
      %s287 = sphi 0, %s287
      %s289 = sphi 0, %s287
      %s290 = sphi 0, %s289
      %s304 = sphi 0, %s290
      %s310 = sphi 0, %s312
      %s313 = sphi 0, %s310
      %s314 = sphi 0, %s313
      %s330 = sphi 0, %s314
    $region4: #{tpu_custom_call.1} parent=1 // loop_header_branch
      %25 = sbr.rel (%p23) target = $region8
    $region5: #{tpu_custom_call.1} parent=1 // loop_body
      %s27 = ssub.s32 %s22, 1
      %s28 = ssub.s32 %s22, 2
      %s29 = sadd.s32 %s22, 1
      %s30 = ssub.s32 %s22, %s29
      %p31 = scmp.eq.s32.totalorder %s30, 0
      %s33 = sadd.s32 %s32, 1
      %s34 = scalar_select %p31, %s32, %s33
      %p37 = pneg %p31
      %p38 = scmp.eq.s32.totalorder %s22, 1
      %p39 = por %p37, %p38
      %p40 = scmp.ne.s32.totalorder %s32, %s35
      %p41 = scmp.eq.s32.totalorder %s22, 0
      %p42 = por %p40, %p41
      %p43 = scmp.ne.s32.totalorder %s32, %s35
      %p44 = scmp.eq.s32.totalorder %s27, 1
      %p45 = por %p43, %p44
      %p46 = scmp.ne.s32.totalorder %s35, %s36
      %p47 = scmp.eq.s32.totalorder %s27, 0
      %p48 = por %p46, %p47
      %p49 = scmp.ne.s32.totalorder %s35, %s36
      %p50 = scmp.eq.s32.totalorder %s28, 1
      %p51 = por %p49, %p50
      %p53 = scmp.ne.s32.totalorder %s36, %s52
      %p54 = scmp.eq.s32.totalorder %s28, 0
      %p55 = por %p53, %p54
      %s57 = sadd.s32 %s56, 1
      %p60 = scmp.eq.s32.totalorder %s22, 1
      %p61 = scmp.ne.s32.totalorder %s56, %s58
      %p62 = scmp.eq.s32.totalorder %s22, 0
      %p63 = por %p61, %p62
      %p64 = scmp.ne.s32.totalorder %s56, %s58
      %p65 = scmp.eq.s32.totalorder %s27, 1
      %p66 = por %p64, %p65
      %p67 = scmp.ne.s32.totalorder %s58, %s59
      %p68 = scmp.eq.s32.totalorder %s27, 0
      %p69 = por %p67, %p68
      %p70 = scmp.ne.s32.totalorder %s58, %s59
      %p71 = scmp.eq.s32.totalorder %s28, 1
      %p72 = por %p70, %p71
      %p74 = scmp.ne.s32.totalorder %s59, %s73
      %p75 = scmp.eq.s32.totalorder %s28, 0
      %p76 = por %p74, %p75
      %s78 = sadd.s32 %s77, 1
      %p81 = scmp.eq.s32.totalorder %s22, 1
      %p82 = scmp.ne.s32.totalorder %s77, %s79
      %p83 = scmp.eq.s32.totalorder %s22, 0
      %p84 = por %p82, %p83
      %p85 = scmp.ne.s32.totalorder %s77, %s79
      %p86 = scmp.eq.s32.totalorder %s27, 1
      %p87 = por %p85, %p86
      %p88 = scmp.ne.s32.totalorder %s79, %s80
      %p89 = scmp.eq.s32.totalorder %s27, 0
      %p90 = por %p88, %p89
      %p91 = scmp.ne.s32.totalorder %s79, %s80
      %p92 = scmp.eq.s32.totalorder %s28, 1
      %p93 = por %p91, %p92
      %p95 = scmp.ne.s32.totalorder %s80, %s94
      %p96 = scmp.eq.s32.totalorder %s28, 0
      %p97 = por %p95, %p96
      %s99 = sadd.s32 %s98, 1
      %p102 = scmp.eq.s32.totalorder %s22, 1
      %p103 = scmp.ne.s32.totalorder %s98, %s100
      %p104 = scmp.eq.s32.totalorder %s22, 0
      %p105 = por %p103, %p104
      %p106 = scmp.ne.s32.totalorder %s98, %s100
      %p107 = scmp.eq.s32.totalorder %s27, 1
      %p108 = por %p106, %p107
      %p109 = scmp.ne.s32.totalorder %s100, %s101
      %p110 = scmp.eq.s32.totalorder %s27, 0
      %p111 = por %p109, %p110
      %p112 = scmp.ne.s32.totalorder %s100, %s101
      %p113 = scmp.eq.s32.totalorder %s28, 1
      %p114 = por %p112, %p113
      %p116 = scmp.ne.s32.totalorder %s101, %s115
      %p117 = scmp.eq.s32.totalorder %s28, 0
      %p118 = por %p116, %p117
      %s120 = sadd.s32 %s119, 1
      %p123 = scmp.eq.s32.totalorder %s22, 1
      %p124 = scmp.ne.s32.totalorder %s119, %s121
      %p125 = scmp.eq.s32.totalorder %s22, 0
      %p126 = por %p124, %p125
      %p127 = scmp.ne.s32.totalorder %s119, %s121
      %p128 = scmp.eq.s32.totalorder %s27, 1
      %p129 = por %p127, %p128
      %p130 = scmp.ne.s32.totalorder %s121, %s122
      %p131 = scmp.eq.s32.totalorder %s27, 0
      %p132 = por %p130, %p131
      %p133 = scmp.ne.s32.totalorder %s121, %s122
      %p134 = scmp.eq.s32.totalorder %s28, 1
      %p135 = por %p133, %p134
      %p137 = scmp.ne.s32.totalorder %s122, %s136
      %p138 = scmp.eq.s32.totalorder %s28, 0
      %p139 = por %p137, %p138
      %s141 = sadd.s32 %s140, 1
      %p144 = scmp.eq.s32.totalorder %s22, 1
      %p145 = scmp.ne.s32.totalorder %s140, %s142
      %p146 = scmp.eq.s32.totalorder %s22, 0
      %p147 = por %p145, %p146
      %p148 = scmp.ne.s32.totalorder %s140, %s142
      %p149 = scmp.eq.s32.totalorder %s27, 1
      %p150 = por %p148, %p149
      %p151 = scmp.ne.s32.totalorder %s142, %s143
      %p152 = scmp.eq.s32.totalorder %s27, 0
      %p153 = por %p151, %p152
      %p154 = scmp.ne.s32.totalorder %s142, %s143
      %p155 = scmp.eq.s32.totalorder %s28, 1
      %p156 = por %p154, %p155
      %p158 = scmp.ne.s32.totalorder %s143, %s157
      %p159 = scmp.eq.s32.totalorder %s28, 0
      %p160 = por %p158, %p159
      %s162 = sadd.s32 %s161, 1
      %p165 = scmp.eq.s32.totalorder %s22, 1
      %p166 = scmp.ne.s32.totalorder %s161, %s163
      %p167 = scmp.eq.s32.totalorder %s22, 0
      %p168 = por %p166, %p167
      %p169 = scmp.ne.s32.totalorder %s161, %s163
      %p170 = scmp.eq.s32.totalorder %s27, 1
      %p171 = por %p169, %p170
      %p172 = scmp.ne.s32.totalorder %s163, %s164
      %p173 = scmp.eq.s32.totalorder %s27, 0
      %p174 = por %p172, %p173
      %p175 = scmp.ne.s32.totalorder %s163, %s164
      %p176 = scmp.eq.s32.totalorder %s28, 1
      %p177 = por %p175, %p176
      %p179 = scmp.ne.s32.totalorder %s164, %s178
      %p180 = scmp.eq.s32.totalorder %s28, 0
      %p181 = por %p179, %p180
      %s183 = sadd.s32 %s182, 1
      %p186 = scmp.eq.s32.totalorder %s22, 1
      %p187 = scmp.ne.s32.totalorder %s182, %s184
      %p188 = scmp.eq.s32.totalorder %s22, 0
      %p189 = por %p187, %p188
      %p190 = scmp.ne.s32.totalorder %s182, %s184
      %p191 = scmp.eq.s32.totalorder %s27, 1
      %p192 = por %p190, %p191
      %p193 = scmp.ne.s32.totalorder %s184, %s185
      %p194 = scmp.eq.s32.totalorder %s27, 0
      %p195 = por %p193, %p194
      %p196 = scmp.ne.s32.totalorder %s184, %s185
      %p197 = scmp.eq.s32.totalorder %s28, 1
      %p198 = por %p196, %p197
      %p200 = scmp.ne.s32.totalorder %s185, %s199
      %p201 = scmp.eq.s32.totalorder %s28, 0
      %p202 = por %p200, %p201
      %s204 = sadd.s32 %s203, 1
      %p207 = scmp.eq.s32.totalorder %s22, 1
      %p208 = scmp.ne.s32.totalorder %s203, %s205
      %p209 = scmp.eq.s32.totalorder %s22, 0
      %p210 = por %p208, %p209
      %p211 = scmp.ne.s32.totalorder %s203, %s205
      %p212 = scmp.eq.s32.totalorder %s27, 1
      %p213 = por %p211, %p212
      %p214 = scmp.ne.s32.totalorder %s205, %s206
      %p215 = scmp.eq.s32.totalorder %s27, 0
      %p216 = por %p214, %p215
      %p217 = scmp.ne.s32.totalorder %s205, %s206
      %p218 = scmp.eq.s32.totalorder %s28, 1
      %p219 = por %p217, %p218
      %p221 = scmp.ne.s32.totalorder %s206, %s220
      %p222 = scmp.eq.s32.totalorder %s28, 0
      %p223 = por %p221, %p222
      %s225 = sadd.s32 %s224, 1
      %p228 = scmp.eq.s32.totalorder %s22, 1
      %p229 = scmp.ne.s32.totalorder %s224, %s226
      %p230 = scmp.eq.s32.totalorder %s22, 0
      %p231 = por %p229, %p230
      %p232 = scmp.ne.s32.totalorder %s224, %s226
      %p233 = scmp.eq.s32.totalorder %s27, 1
      %p234 = por %p232, %p233
      %p235 = scmp.ne.s32.totalorder %s226, %s227
      %p236 = scmp.eq.s32.totalorder %s27, 0
      %p237 = por %p235, %p236
      %p238 = scmp.ne.s32.totalorder %s226, %s227
      %p239 = scmp.eq.s32.totalorder %s28, 1
      %p240 = por %p238, %p239
      %p242 = scmp.ne.s32.totalorder %s227, %s241
      %p243 = scmp.eq.s32.totalorder %s28, 0
      %p244 = por %p242, %p243
      %s246 = sadd.s32 %s245, 1
      %p249 = scmp.eq.s32.totalorder %s22, 1
      %p250 = scmp.ne.s32.totalorder %s245, %s247
      %p251 = scmp.eq.s32.totalorder %s22, 0
      %p252 = por %p250, %p251
      %p253 = scmp.ne.s32.totalorder %s245, %s247
      %p254 = scmp.eq.s32.totalorder %s27, 1
      %p255 = por %p253, %p254
      %p256 = scmp.ne.s32.totalorder %s247, %s248
      %p257 = scmp.eq.s32.totalorder %s27, 0
      %p258 = por %p256, %p257
      %p259 = scmp.ne.s32.totalorder %s247, %s248
      %p260 = scmp.eq.s32.totalorder %s28, 1
      %p261 = por %p259, %p260
      %p263 = scmp.ne.s32.totalorder %s248, %s262
      %p264 = scmp.eq.s32.totalorder %s28, 0
      %p265 = por %p263, %p264
      %s267 = sadd.s32 %s266, 1
      %p270 = scmp.eq.s32.totalorder %s22, 1
      %p271 = scmp.ne.s32.totalorder %s266, %s268
      %p272 = scmp.eq.s32.totalorder %s22, 0
      %p273 = por %p271, %p272
      %p274 = scmp.ne.s32.totalorder %s266, %s268
      %p275 = scmp.eq.s32.totalorder %s27, 1
      %p276 = por %p274, %p275
      %p277 = scmp.ne.s32.totalorder %s268, %s269
      %p278 = scmp.eq.s32.totalorder %s27, 0
      %p279 = por %p277, %p278
      %p280 = scmp.ne.s32.totalorder %s268, %s269
      %p281 = scmp.eq.s32.totalorder %s28, 1
      %p282 = por %p280, %p281
      %p284 = scmp.ne.s32.totalorder %s269, %s283
      %p285 = scmp.eq.s32.totalorder %s28, 0
      %p286 = por %p284, %p285
      %s288 = sadd.s32 %s287, 1
      %p291 = scmp.eq.s32.totalorder %s22, 1
      %p292 = scmp.ne.s32.totalorder %s287, %s289
      %p293 = scmp.eq.s32.totalorder %s22, 0
      %p294 = por %p292, %p293
      %p295 = scmp.ne.s32.totalorder %s287, %s289
      %p296 = scmp.eq.s32.totalorder %s27, 1
      %p297 = por %p295, %p296
      %p298 = scmp.ne.s32.totalorder %s289, %s290
      %p299 = scmp.eq.s32.totalorder %s27, 0
      %p300 = por %p298, %p299
      %p301 = scmp.ne.s32.totalorder %s289, %s290
      %p302 = scmp.eq.s32.totalorder %s28, 1
      %p303 = por %p301, %p302
      %p305 = scmp.ne.s32.totalorder %s290, %s304
      %p306 = scmp.eq.s32.totalorder %s28, 0
      %p307 = por %p305, %p306
      %s308 = ssub.s32 %s22, %s29
      %p309 = scmp.eq.s32.totalorder %s308, 0
      %s311 = sadd.s32 %s310, 1
      %s312 = scalar_select %p309, %s310, %s311
      %p315 = pneg %p309
      %p316 = scmp.eq.s32.totalorder %s22, 1
      %p317 = por %p315, %p316
      %p318 = scmp.ne.s32.totalorder %s310, %s313
      %p319 = scmp.eq.s32.totalorder %s22, 0
      %p320 = por %p318, %p319
      %p321 = scmp.ne.s32.totalorder %s310, %s313
      %p322 = scmp.eq.s32.totalorder %s27, 1
      %p323 = por %p321, %p322
      %p324 = scmp.ne.s32.totalorder %s313, %s314
      %p325 = scmp.eq.s32.totalorder %s27, 0
      %p326 = por %p324, %p325
      %p327 = scmp.ne.s32.totalorder %s313, %s314
      %p328 = scmp.eq.s32.totalorder %s28, 1
      %p329 = por %p327, %p328
      %p331 = scmp.ne.s32.totalorder %s314, %s330
      %p332 = scmp.eq.s32.totalorder %s28, 0
      %p333 = por %p331, %p332
      %p334 = scmp.le.s32.totalorder 1, %s22
      %p335 = scmp.lt.s32.totalorder %s22, 3
      %p336 = pnand %p334, %p335
      %p337 = pneg %p336
      // Predicated region
      $region9: #{tpu_custom_call.1} parent=5 // pred_check
        _
      $region10: #{tpu_custom_call.1} parent=5 // pred_check_branch
        %339 = sbr.rel (%p336) target = $region12
      $region11: #{tpu_custom_call.1} parent=5 // pred_region
        %s340 = ssub.s32 %s22, 1
        // Predicated region
        $region13: #{tpu_custom_call.1} parent=11 // pred_check
          %p341 = pneg %p69
        $region14: #{tpu_custom_call.1} parent=11 // pred_check_branch
          %343 = sbr.rel (%p341) target = $region16
        $region15: #{tpu_custom_call.1} parent=11 // pred_region
          _
        $region16: #{tpu_custom_call.1} parent=11 // pred_fallthru
          _
        // Predicated region
        $region17: #{tpu_custom_call.1} parent=11 // pred_check
          %p344 = pneg %p90
        $region18: #{tpu_custom_call.1} parent=11 // pred_check_branch
          %346 = sbr.rel (%p344) target = $region20
        $region19: #{tpu_custom_call.1} parent=11 // pred_region
          _
        $region20: #{tpu_custom_call.1} parent=11 // pred_fallthru
          _
        // Predicated region
        $region21: #{tpu_custom_call.1} parent=11 // pred_check
          %p347 = pneg %p111
        $region22: #{tpu_custom_call.1} parent=11 // pred_check_branch
          %349 = sbr.rel (%p347) target = $region24
        $region23: #{tpu_custom_call.1} parent=11 // pred_region
          _
        $region24: #{tpu_custom_call.1} parent=11 // pred_fallthru
          _
        // Predicated region
        $region25: #{tpu_custom_call.1} parent=11 // pred_check
          %p350 = pneg %p132
        $region26: #{tpu_custom_call.1} parent=11 // pred_check_branch
          %352 = sbr.rel (%p350) target = $region28
        $region27: #{tpu_custom_call.1} parent=11 // pred_region
          _
        $region28: #{tpu_custom_call.1} parent=11 // pred_fallthru
          _
        // Predicated region
        $region29: #{tpu_custom_call.1} parent=11 // pred_check
          %p353 = pneg %p153
        $region30: #{tpu_custom_call.1} parent=11 // pred_check_branch
          %355 = sbr.rel (%p353) target = $region32
        $region31: #{tpu_custom_call.1} parent=11 // pred_region
          _
        $region32: #{tpu_custom_call.1} parent=11 // pred_fallthru
          _
        // Predicated region
        $region33: #{tpu_custom_call.1} parent=11 // pred_check
          %p356 = pneg %p174
        $region34: #{tpu_custom_call.1} parent=11 // pred_check_branch
          %358 = sbr.rel (%p356) target = $region36
        $region35: #{tpu_custom_call.1} parent=11 // pred_region
          _
        $region36: #{tpu_custom_call.1} parent=11 // pred_fallthru
          _
        // Predicated region
        $region37: #{tpu_custom_call.1} parent=11 // pred_check
          %p359 = pneg %p195
        $region38: #{tpu_custom_call.1} parent=11 // pred_check_branch
          %361 = sbr.rel (%p359) target = $region40
        $region39: #{tpu_custom_call.1} parent=11 // pred_region
          _
        $region40: #{tpu_custom_call.1} parent=11 // pred_fallthru
          _
        // Predicated region
        $region41: #{tpu_custom_call.1} parent=11 // pred_check
          %p362 = pneg %p216
        $region42: #{tpu_custom_call.1} parent=11 // pred_check_branch
          %364 = sbr.rel (%p362) target = $region44
        $region43: #{tpu_custom_call.1} parent=11 // pred_region
          _
        $region44: #{tpu_custom_call.1} parent=11 // pred_fallthru
          _
        // Predicated region
        $region45: #{tpu_custom_call.1} parent=11 // pred_check
          %p365 = pneg %p237
        $region46: #{tpu_custom_call.1} parent=11 // pred_check_branch
          %367 = sbr.rel (%p365) target = $region48
        $region47: #{tpu_custom_call.1} parent=11 // pred_region
          _
        $region48: #{tpu_custom_call.1} parent=11 // pred_fallthru
          _
        // Predicated region
        $region49: #{tpu_custom_call.1} parent=11 // pred_check
          %p368 = pneg %p258
        $region50: #{tpu_custom_call.1} parent=11 // pred_check_branch
          %370 = sbr.rel (%p368) target = $region52
        $region51: #{tpu_custom_call.1} parent=11 // pred_region
          _
        $region52: #{tpu_custom_call.1} parent=11 // pred_fallthru
          _
        // Predicated region
        $region53: #{tpu_custom_call.1} parent=11 // pred_check
          %p371 = pneg %p279
        $region54: #{tpu_custom_call.1} parent=11 // pred_check_branch
          %373 = sbr.rel (%p371) target = $region56
        $region55: #{tpu_custom_call.1} parent=11 // pred_region
          _
        $region56: #{tpu_custom_call.1} parent=11 // pred_fallthru
          _
        // Predicated region
        $region57: #{tpu_custom_call.1} parent=11 // pred_check
          %p374 = pneg %p300
        $region58: #{tpu_custom_call.1} parent=11 // pred_check_branch
          %376 = sbr.rel (%p374) target = $region60
        $region59: #{tpu_custom_call.1} parent=11 // pred_region
          _
        $region60: #{tpu_custom_call.1} parent=11 // pred_fallthru
          _
      $region12: #{tpu_custom_call.1} parent=5 // pred_fallthru
        _
      %p377 = scmp.lt.s32.totalorder %s22, 2
      // Predicated region
      $region61: #{tpu_custom_call.1} parent=5 // pred_check
        %p378 = pneg %p377
      $region62: #{tpu_custom_call.1} parent=5 // pred_check_branch
        %380 = sbr.rel (%p378) target = $region64
      $region63: #{tpu_custom_call.1} parent=5 // pred_region
        // Predicated region
        $region65: #{tpu_custom_call.1} parent=63 // pred_check
          %p381 = pneg %p42
        $region66: #{tpu_custom_call.1} parent=63 // pred_check_branch
          %383 = sbr.rel (%p381) target = $region68
        $region67: #{tpu_custom_call.1} parent=63 // pred_region
          %p384 = scmp.lt.s32.totalorder %s22, 1
          %s385 = scalar_select %p384, %s22, 1
          %s386 = smul.addr %s385, 8
          %s387 = scalar_lea.vmem %s0, %s386
        $region68: #{tpu_custom_call.1} parent=63 // pred_fallthru
          _
      $region64: #{tpu_custom_call.1} parent=5 // pred_fallthru
        _
      %p388 = scmp.le.s32.totalorder 1, %s22
      %p389 = scmp.lt.s32.totalorder %s22, 3
      %p390 = pnand %p388, %p389
      %p391 = pneg %p390
      // Predicated region
      $region69: #{tpu_custom_call.1} parent=5 // pred_check
        _
      $region70: #{tpu_custom_call.1} parent=5 // pred_check_branch
        %393 = sbr.rel (%p390) target = $region72
      $region71: #{tpu_custom_call.1} parent=5 // pred_region
        %s394 = ssub.s32 %s22, 1
        %p395 = scmp.lt.s32.totalorder %s27, 1
        %s396 = scalar_select %p395, %s27, 1
        %s397 = smul.addr %s396, 8
        %s398 = scalar_lea.vmem %s0, %s397
        %p399 = pneg %p48
        %p400 = pneg %p45
        %p401 = pneg %p69
        %p402 = pneg %p66
        %p403 = pneg %p90
        %p404 = pneg %p87
        %p405 = pneg %p111
        %p406 = pneg %p108
        %p407 = pneg %p132
        %p408 = pneg %p129
        %p409 = pneg %p153
        %p410 = pneg %p150
        %p411 = pneg %p174
        %p412 = pneg %p171
        %p413 = pneg %p195
        %p414 = pneg %p192
        %p415 = pneg %p216
        %p416 = pneg %p213
        %p417 = pneg %p237
        %p418 = pneg %p234
        %p419 = pneg %p258
        %p420 = pneg %p255
        %p421 = pneg %p279
        %p422 = pneg %p276
        %p423 = pneg %p300
        %p424 = pneg %p297
        %p425 = pneg %p326
        %p426 = pneg %p323
        %s427 = sand.u32 %s313, 1
        %s428 = scalar_lea.sflag [#allocation3], %s427
        %s429 = sand.u32 %s313, 1
        %s430 = smul.addr %s429, 8
        %s431 = scalar_lea.vmem [#allocation2], %s430
        %p432 = scmp.lt.s32.totalorder %s27, 1
        %s433 = scalar_select %p432, %s27, 1
        %s434 = smul.addr %s433, 8
        %s435 = scalar_lea.vmem %s0, %s434
        %v437 = vld [vmem:[%s435] sm:$0xff]
        %v438 = vld [vmem:[%s1] sm:$0x1]
        %v439 = vld [vmem:[%s2] sm:$0x1]
        %vm440 = vcmask 261120
        %v441 = vsel %vm440, %v437, 0.0
        %442 = vadd.xlane.f32.xlu0 %v441
        %v443 = vpop.xlane.xlu0 %442
        %v444 = vrcp.pop 32.0
        %v445 = vmul.f32 %v443, %v444
        %v446 = vsub.f32 %v437, %v445
        %v447 = vmul.f32 %v446, %v446
        %v448 = vsel %vm440, %v447, 0.0
        %449 = vadd.xlane.f32.xlu0 %v448
        %v450 = vpop.xlane.xlu0 %449
        %v451 = vmul.f32 %v450, %v444
        %v452 = vadd.f32 %v451, 1e-05
        %v453 = vrsqrt.pop %v452
        %v454 = vmul.f32 %v446, %v453
        %v456 = vlaneseq
        %v457 = vshrl.u32 %v456, 7
        %v458 = vsub.s32 0, %v457
        %v459 = vrot.slane %v438, %v458
        %v461 = vmul.f32 %v454, %v459
        %v463 = vlaneseq
        %v464 = vshrl.u32 %v463, 7
        %v465 = vsub.s32 0, %v464
        %v466 = vrot.slane %v439, %v465
        %v468 = vadd.f32 %v461, %v466
        %v469 = vpack.c.bf16 %v468, %v468
        %v470 = vld [vmem:[%s3] sm:$0xf]
        %v471 = vld [vmem:[%s3 + $0x4] sm:$0xf]
        %v472 = vld [vmem:[%s3 + $0x8] sm:$0xf]
        %v473 = vld [vmem:[%s3 + $0xc] sm:$0xf]
        %v474 = vld [vmem:[%s4] sm:$0x1]
        %v476 = vlaneseq
        %v477 = vshrl.u32 %v476, 7
        %v478 = vsub.s32 0, %v477
        %v479 = vrot.slane %v474, %v478
        %v485 = vunpack.c.l.b16 %v470
        %v486 = vunpack.c.l.b16 %v471
        %v487 = vunpack.c.l.b16 %v472
        %v488 = vunpack.c.l.b16 %v473
        %v489 = vpack.c.b16 %v486, %v485
        %v490 = vpack.c.b16 %v488, %v487
        %v494 = vsel %vm440, %v469, 0
        %496 = vmatprep.subr.bf16.mxu0 0
        %497 = vmatpush1.bf16.msra.mxu0 %v489
        %498 = vmatprep.subr.bf16.mxu0 0
        %499 = vmatpush1.bf16.msra.mxu0 %v490
        %500 = vmatprep.subr.bf16.mxu0 0
        %501 = vmatpush1.bf16.msra.mxu0 0
        %502 = vmatprep.subr.bf16.mxu0 0
        %503 = vmatpush1.bf16.msra.mxu0 0
        %504 = vmatprep.subr.bf16.mxu0 0
        %505 = vmatpush1.bf16.msra.mxu0 0
        %506 = vmatprep.subr.bf16.mxu0 0
        %507 = vmatpush1.bf16.msra.mxu0 0
        %508 = vmatprep.subr.bf16.mxu0 0
        %509 = vmatpush1.bf16.msra.mxu0 0
        %510 = vmatprep.subr.bf16.mxu0 0
        %511 = vmatpush1.bf16.msra.mxu0 0
        %512 = vmatprep.subr.bf16.mxu0 0
        %513 = vmatpush1.bf16.msra.mxu0 0
        %514 = vmatprep.subr.bf16.mxu0 0
        %515 = vmatpush1.bf16.msra.mxu0 0
        %516 = vmatprep.subr.bf16.mxu0 0
        %517 = vmatpush1.bf16.msra.mxu0 0
        %518 = vmatprep.subr.bf16.mxu0 0
        %519 = vmatpush1.bf16.msra.mxu0 0
        %520 = vmatprep.subr.bf16.mxu0 0
        %521 = vmatpush1.bf16.msra.mxu0 0
        %522 = vmatprep.subr.bf16.mxu0 0
        %523 = vmatpush1.bf16.msra.mxu0 0
        %524 = vmatprep.subr.bf16.mxu0 0
        %525 = vmatpush1.bf16.msra.mxu0 0
        %526 = vmatprep.subr.bf16.mxu0 0
        %527 = vmatpush1.bf16.msra.mxu0 0
        %528 = vmatprep.mubr.bf16.mxu0 0
        %529 = vmatmul.mubr.bf16.gmra.mrb[0].mxu0 %v494
        %v530 = vpop.f32.mrb[0].mxu0
        %v531 = vadd.f32 %v479, %v530
        %v532 = vpop.f32.mrb[0].mxu0
        %v533 = vpop.f32.mrb[0].mxu0
        %v534 = vpop.f32.mrb[0].mxu0
        %535 = vdwg.mxu0
        %v536 = vmul.f32 %v531, 0.35355338
        %538 = vrot.lane.b32.xlu0 %v536, 120
        %v539 = vpop.permute.xlu0 %538
        %541 = vrot.lane.b32.xlu0 %v536, 112
        %v542 = vpop.permute.xlu0 %541
        %544 = vrot.lane.b32.xlu0 %v536, 104
        %v545 = vpop.permute.xlu0 %544
        %v547 = vcombine.low %v536, %v542
        %v548 = vcombine.high %v536, %v542
        %v550 = vunpack.c.l.s4 1983009808
        %v551 = vunpack.c.0.s8 %v550
        %v552 = vlaneseq
        %v553 = vshrl.u32 %v552, 7
        %v554 = vsub.s32 %v551, %v553
        %v555 = vrot.slane %v547, %v554
        %v557 = vunpack.c.l.s4 1983009808
        %v558 = vunpack.c.0.s8 %v557
        %v559 = vlaneseq
        %v560 = vshrl.u32 %v559, 7
        %v561 = vsub.s32 %v558, %v560
        %v562 = vrot.slane %v548, %v561
        %v563 = vcombine.low %v539, %v545
        %v564 = vcombine.high %v539, %v545
        %v566 = vunpack.c.l.s4 1983009808
        %v567 = vunpack.c.0.s8 %v566
        %v568 = vlaneseq
        %v569 = vshrl.u32 %v568, 7
        %v570 = vsub.s32 %v567, %v569
        %v571 = vrot.slane %v563, %v570
        %v573 = vunpack.c.l.s4 1983009808
        %v574 = vunpack.c.0.s8 %v573
        %v575 = vlaneseq
        %v576 = vshrl.u32 %v575, 7
        %v577 = vsub.s32 %v574, %v576
        %v578 = vrot.slane %v564, %v577
        %v579 = vcombine.low %v555, %v571
        %v580 = vcombine.high %v555, %v571
        %v582 = vunpack.c.l.s4 1934713408
        %v583 = vunpack.c.0.s8 %v582
        %v584 = vlaneseq
        %v585 = vshrl.u32 %v584, 7
        %v586 = vsub.s32 %v583, %v585
        %v587 = vrot.slane %v579, %v586
        %v589 = vunpack.c.l.s4 1934713408
        %v590 = vunpack.c.0.s8 %v589
        %v591 = vlaneseq
        %v592 = vshrl.u32 %v591, 7
        %v593 = vsub.s32 %v590, %v592
        %v594 = vrot.slane %v580, %v593
        %v595 = vcombine.low %v562, %v578
        %v596 = vcombine.high %v562, %v578
        %v598 = vunpack.c.l.s4 1934713408
        %v599 = vunpack.c.0.s8 %v598
        %v600 = vlaneseq
        %v601 = vshrl.u32 %v600, 7
        %v602 = vsub.s32 %v599, %v601
        %v603 = vrot.slane %v595, %v602
        %v605 = vunpack.c.l.s4 1934713408
        %v606 = vunpack.c.0.s8 %v605
        %v607 = vlaneseq
        %v608 = vshrl.u32 %v607, 7
        %v609 = vsub.s32 %v606, %v608
        %v610 = vrot.slane %v596, %v609
        %v611 = vcombine.high %v587, 0.0
        %v612 = vcombine.high %v594, 0.0
        %v613 = vcombine.high %v603, 0.0
        %v614 = vcombine.high %v610, 0.0
        %v615 = vcombine.low %v587, %v594
        %v617 = vunpack.c.l.s4 1983009808
        %v618 = vunpack.c.0.s8 %v617
        %v619 = vlaneseq
        %v620 = vshrl.u32 %v619, 7
        %v621 = vsub.s32 %v618, %v620
        %v622 = vrot.slane %v615, %v621
        %v623 = vcombine.low %v611, %v612
        %v625 = vunpack.c.l.s4 1983009808
        %v626 = vunpack.c.0.s8 %v625
        %v627 = vlaneseq
        %v628 = vshrl.u32 %v627, 7
        %v629 = vsub.s32 %v626, %v628
        %v630 = vrot.slane %v623, %v629
        %v631 = vcombine.low %v603, %v610
        %v633 = vunpack.c.l.s4 1983009808
        %v634 = vunpack.c.0.s8 %v633
        %v635 = vlaneseq
        %v636 = vshrl.u32 %v635, 7
        %v637 = vsub.s32 %v634, %v636
        %v638 = vrot.slane %v631, %v637
        %v639 = vcombine.low %v613, %v614
        %v641 = vunpack.c.l.s4 1983009808
        %v642 = vunpack.c.0.s8 %v641
        %v643 = vlaneseq
        %v644 = vshrl.u32 %v643, 7
        %v645 = vsub.s32 %v642, %v644
        %v646 = vrot.slane %v639, %v645
        %v647 = vcombine.low %v622, %v630
        %v648 = vcombine.high %v622, %v630
        %v650 = vunpack.c.l.s4 1934713408
        %v651 = vunpack.c.0.s8 %v650
        %v652 = vlaneseq
        %v653 = vshrl.u32 %v652, 7
        %v654 = vsub.s32 %v651, %v653
        %v655 = vrot.slane %v647, %v654
        %v657 = vunpack.c.l.s4 1934713408
        %v658 = vunpack.c.0.s8 %v657
        %v659 = vlaneseq
        %v660 = vshrl.u32 %v659, 7
        %v661 = vsub.s32 %v658, %v660
        %v662 = vrot.slane %v648, %v661
        %v663 = vcombine.low %v638, %v646
        %v664 = vcombine.high %v638, %v646
        %v666 = vunpack.c.l.s4 1934713408
        %v667 = vunpack.c.0.s8 %v666
        %v668 = vlaneseq
        %v669 = vshrl.u32 %v668, 7
        %v670 = vsub.s32 %v667, %v669
        %v671 = vrot.slane %v663, %v670
        %v673 = vunpack.c.l.s4 1934713408
        %v674 = vunpack.c.0.s8 %v673
        %v675 = vlaneseq
        %v676 = vshrl.u32 %v675, 7
        %v677 = vsub.s32 %v674, %v676
        %v678 = vrot.slane %v664, %v677
        %v679 = vcombine.low %v655, %v671
        %v680 = vcombine.high %v655, %v671
        %v681 = vcombine.low %v662, %v678
        %v682 = vcombine.high %v662, %v678
        %v683 = vpack.c.bf16 %v679, %v679
        %v684 = vpack.c.bf16 %v680, %v680
        %v685 = vpack.c.bf16 %v681, %v681
        %v686 = vpack.c.bf16 %v682, %v682
        %688 = vrot.lane.b32.xlu0 %v531, 120
        %v689 = vpop.permute.xlu0 %688
        %690 = vrot.lane.b32.xlu0 %v531, 112
        %v691 = vpop.permute.xlu0 %690
        %692 = vrot.lane.b32.xlu0 %v531, 104
        %v693 = vpop.permute.xlu0 %692
        %694 = vrot.lane.b32.xlu0 %v531, 96
        %v695 = vpop.permute.xlu0 %694
        %696 = vrot.lane.b32.xlu0 %v689, 96
        %v697 = vpop.permute.xlu0 %696
        %698 = vrot.lane.b32.xlu0 %v691, 96
        %v699 = vpop.permute.xlu0 %698
        %700 = vrot.lane.b32.xlu0 %v693, 96
        %v701 = vpop.permute.xlu0 %700
        %v706 = vcombine.low %v695, %v699
        %v707 = vcombine.high %v695, %v699
        %v709 = vunpack.c.l.s4 1983009808
        %v710 = vunpack.c.0.s8 %v709
        %v711 = vlaneseq
        %v712 = vshrl.u32 %v711, 7
        %v713 = vsub.s32 %v710, %v712
        %v714 = vrot.slane %v706, %v713
        %v716 = vunpack.c.l.s4 1983009808
        %v717 = vunpack.c.0.s8 %v716
        %v718 = vlaneseq
        %v719 = vshrl.u32 %v718, 7
        %v720 = vsub.s32 %v717, %v719
        %v721 = vrot.slane %v707, %v720
        %v722 = vcombine.low %v697, %v701
        %v723 = vcombine.high %v697, %v701
        %v725 = vunpack.c.l.s4 1983009808
        %v726 = vunpack.c.0.s8 %v725
        %v727 = vlaneseq
        %v728 = vshrl.u32 %v727, 7
        %v729 = vsub.s32 %v726, %v728
        %v730 = vrot.slane %v722, %v729
        %v732 = vunpack.c.l.s4 1983009808
        %v733 = vunpack.c.0.s8 %v732
        %v734 = vlaneseq
        %v735 = vshrl.u32 %v734, 7
        %v736 = vsub.s32 %v733, %v735
        %v737 = vrot.slane %v723, %v736
        %v738 = vcombine.low %v714, %v730
        %v739 = vcombine.high %v714, %v730
        %v741 = vunpack.c.l.s4 1934713408
        %v742 = vunpack.c.0.s8 %v741
        %v743 = vlaneseq
        %v744 = vshrl.u32 %v743, 7
        %v745 = vsub.s32 %v742, %v744
        %v746 = vrot.slane %v738, %v745
        %v748 = vunpack.c.l.s4 1934713408
        %v749 = vunpack.c.0.s8 %v748
        %v750 = vlaneseq
        %v751 = vshrl.u32 %v750, 7
        %v752 = vsub.s32 %v749, %v751
        %v753 = vrot.slane %v739, %v752
        %v754 = vcombine.low %v721, %v737
        %v755 = vcombine.high %v721, %v737
        %v757 = vunpack.c.l.s4 1934713408
        %v758 = vunpack.c.0.s8 %v757
        %v759 = vlaneseq
        %v760 = vshrl.u32 %v759, 7
        %v761 = vsub.s32 %v758, %v760
        %v762 = vrot.slane %v754, %v761
        %v764 = vunpack.c.l.s4 1934713408
        %v765 = vunpack.c.0.s8 %v764
        %v766 = vlaneseq
        %v767 = vshrl.u32 %v766, 7
        %v768 = vsub.s32 %v765, %v767
        %v769 = vrot.slane %v755, %v768
        %v770 = vcombine.high %v746, 0.0
        %v771 = vcombine.high %v753, 0.0
        %v772 = vcombine.high %v762, 0.0
        %v773 = vcombine.high %v769, 0.0
        %v774 = vcombine.low %v746, %v753
        %v776 = vunpack.c.l.s4 1983009808
        %v777 = vunpack.c.0.s8 %v776
        %v778 = vlaneseq
        %v779 = vshrl.u32 %v778, 7
        %v780 = vsub.s32 %v777, %v779
        %v781 = vrot.slane %v774, %v780
        %v782 = vcombine.low %v770, %v771
        %v784 = vunpack.c.l.s4 1983009808
        %v785 = vunpack.c.0.s8 %v784
        %v786 = vlaneseq
        %v787 = vshrl.u32 %v786, 7
        %v788 = vsub.s32 %v785, %v787
        %v789 = vrot.slane %v782, %v788
        %v790 = vcombine.low %v762, %v769
        %v792 = vunpack.c.l.s4 1983009808
        %v793 = vunpack.c.0.s8 %v792
        %v794 = vlaneseq
        %v795 = vshrl.u32 %v794, 7
        %v796 = vsub.s32 %v793, %v795
        %v797 = vrot.slane %v790, %v796
        %v798 = vcombine.low %v772, %v773
        %v800 = vunpack.c.l.s4 1983009808
        %v801 = vunpack.c.0.s8 %v800
        %v802 = vlaneseq
        %v803 = vshrl.u32 %v802, 7
        %v804 = vsub.s32 %v801, %v803
        %v805 = vrot.slane %v798, %v804
        %v806 = vcombine.low %v781, %v789
        %v807 = vcombine.high %v781, %v789
        %v809 = vunpack.c.l.s4 1934713408
        %v810 = vunpack.c.0.s8 %v809
        %v811 = vlaneseq
        %v812 = vshrl.u32 %v811, 7
        %v813 = vsub.s32 %v810, %v812
        %v814 = vrot.slane %v806, %v813
        %v816 = vunpack.c.l.s4 1934713408
        %v817 = vunpack.c.0.s8 %v816
        %v818 = vlaneseq
        %v819 = vshrl.u32 %v818, 7
        %v820 = vsub.s32 %v817, %v819
        %v821 = vrot.slane %v807, %v820
        %v822 = vcombine.low %v797, %v805
        %v823 = vcombine.high %v797, %v805
        %v825 = vunpack.c.l.s4 1934713408
        %v826 = vunpack.c.0.s8 %v825
        %v827 = vlaneseq
        %v828 = vshrl.u32 %v827, 7
        %v829 = vsub.s32 %v826, %v828
        %v830 = vrot.slane %v822, %v829
        %v832 = vunpack.c.l.s4 1934713408
        %v833 = vunpack.c.0.s8 %v832
        %v834 = vlaneseq
        %v835 = vshrl.u32 %v834, 7
        %v836 = vsub.s32 %v833, %v835
        %v837 = vrot.slane %v823, %v836
        %v838 = vcombine.low %v814, %v830
        %v839 = vcombine.high %v814, %v830
        %v840 = vcombine.low %v821, %v837
        %v841 = vcombine.high %v821, %v837
        %v842 = vpack.c.bf16 %v838, %v838
        %v843 = vpack.c.bf16 %v839, %v839
        %v844 = vpack.c.bf16 %v840, %v840
        %v845 = vpack.c.bf16 %v841, %v841
        %846 = vrot.lane.b32.xlu0 %v531, 64
        %v847 = vpop.permute.xlu0 %846
        %848 = vrot.lane.b32.xlu0 %v689, 64
        %v849 = vpop.permute.xlu0 %848
        %850 = vrot.lane.b32.xlu0 %v691, 64
        %v851 = vpop.permute.xlu0 %850
        %852 = vrot.lane.b32.xlu0 %v693, 64
        %v853 = vpop.permute.xlu0 %852
        %v858 = vcombine.low %v847, %v851
        %v859 = vcombine.high %v847, %v851
        %v861 = vunpack.c.l.s4 1983009808
        %v862 = vunpack.c.0.s8 %v861
        %v863 = vlaneseq
        %v864 = vshrl.u32 %v863, 7
        %v865 = vsub.s32 %v862, %v864
        %v866 = vrot.slane %v858, %v865
        %v868 = vunpack.c.l.s4 1983009808
        %v869 = vunpack.c.0.s8 %v868
        %v870 = vlaneseq
        %v871 = vshrl.u32 %v870, 7
        %v872 = vsub.s32 %v869, %v871
        %v873 = vrot.slane %v859, %v872
        %v874 = vcombine.low %v849, %v853
        %v875 = vcombine.high %v849, %v853
        %v877 = vunpack.c.l.s4 1983009808
        %v878 = vunpack.c.0.s8 %v877
        %v879 = vlaneseq
        %v880 = vshrl.u32 %v879, 7
        %v881 = vsub.s32 %v878, %v880
        %v882 = vrot.slane %v874, %v881
        %v884 = vunpack.c.l.s4 1983009808
        %v885 = vunpack.c.0.s8 %v884
        %v886 = vlaneseq
        %v887 = vshrl.u32 %v886, 7
        %v888 = vsub.s32 %v885, %v887
        %v889 = vrot.slane %v875, %v888
        %v890 = vcombine.low %v866, %v882
        %v891 = vcombine.high %v866, %v882
        %v893 = vunpack.c.l.s4 1934713408
        %v894 = vunpack.c.0.s8 %v893
        %v895 = vlaneseq
        %v896 = vshrl.u32 %v895, 7
        %v897 = vsub.s32 %v894, %v896
        %v898 = vrot.slane %v890, %v897
        %v900 = vunpack.c.l.s4 1934713408
        %v901 = vunpack.c.0.s8 %v900
        %v902 = vlaneseq
        %v903 = vshrl.u32 %v902, 7
        %v904 = vsub.s32 %v901, %v903
        %v905 = vrot.slane %v891, %v904
        %v906 = vcombine.low %v873, %v889
        %v907 = vcombine.high %v873, %v889
        %v909 = vunpack.c.l.s4 1934713408
        %v910 = vunpack.c.0.s8 %v909
        %v911 = vlaneseq
        %v912 = vshrl.u32 %v911, 7
        %v913 = vsub.s32 %v910, %v912
        %v914 = vrot.slane %v906, %v913
        %v916 = vunpack.c.l.s4 1934713408
        %v917 = vunpack.c.0.s8 %v916
        %v918 = vlaneseq
        %v919 = vshrl.u32 %v918, 7
        %v920 = vsub.s32 %v917, %v919
        %v921 = vrot.slane %v907, %v920
        %v922 = vcombine.high %v898, 0.0
        %v923 = vcombine.high %v905, 0.0
        %v924 = vcombine.high %v914, 0.0
        %v925 = vcombine.high %v921, 0.0
        %v926 = vcombine.low %v898, %v905
        %v928 = vunpack.c.l.s4 1983009808
        %v929 = vunpack.c.0.s8 %v928
        %v930 = vlaneseq
        %v931 = vshrl.u32 %v930, 7
        %v932 = vsub.s32 %v929, %v931
        %v933 = vrot.slane %v926, %v932
        %v934 = vcombine.low %v922, %v923
        %v936 = vunpack.c.l.s4 1983009808
        %v937 = vunpack.c.0.s8 %v936
        %v938 = vlaneseq
        %v939 = vshrl.u32 %v938, 7
        %v940 = vsub.s32 %v937, %v939
        %v941 = vrot.slane %v934, %v940
        %v942 = vcombine.low %v914, %v921
        %v944 = vunpack.c.l.s4 1983009808
        %v945 = vunpack.c.0.s8 %v944
        %v946 = vlaneseq
        %v947 = vshrl.u32 %v946, 7
        %v948 = vsub.s32 %v945, %v947
        %v949 = vrot.slane %v942, %v948
        %v950 = vcombine.low %v924, %v925
        %v952 = vunpack.c.l.s4 1983009808
        %v953 = vunpack.c.0.s8 %v952
        %v954 = vlaneseq
        %v955 = vshrl.u32 %v954, 7
        %v956 = vsub.s32 %v953, %v955
        %v957 = vrot.slane %v950, %v956
        %v958 = vcombine.low %v933, %v941
        %v959 = vcombine.high %v933, %v941
        %v961 = vunpack.c.l.s4 1934713408
        %v962 = vunpack.c.0.s8 %v961
        %v963 = vlaneseq
        %v964 = vshrl.u32 %v963, 7
        %v965 = vsub.s32 %v962, %v964
        %v966 = vrot.slane %v958, %v965
        %v968 = vunpack.c.l.s4 1934713408
        %v969 = vunpack.c.0.s8 %v968
        %v970 = vlaneseq
        %v971 = vshrl.u32 %v970, 7
        %v972 = vsub.s32 %v969, %v971
        %v973 = vrot.slane %v959, %v972
        %v974 = vcombine.low %v949, %v957
        %v975 = vcombine.high %v949, %v957
        %v977 = vunpack.c.l.s4 1934713408
        %v978 = vunpack.c.0.s8 %v977
        %v979 = vlaneseq
        %v980 = vshrl.u32 %v979, 7
        %v981 = vsub.s32 %v978, %v980
        %v982 = vrot.slane %v974, %v981
        %v984 = vunpack.c.l.s4 1934713408
        %v985 = vunpack.c.0.s8 %v984
        %v986 = vlaneseq
        %v987 = vshrl.u32 %v986, 7
        %v988 = vsub.s32 %v985, %v987
        %v989 = vrot.slane %v975, %v988
        %v990 = vcombine.low %v966, %v982
        %v991 = vcombine.high %v966, %v982
        %v992 = vcombine.low %v973, %v989
        %v993 = vcombine.high %v973, %v989
        %v994 = vpack.c.bf16 %v990, %v990
        %v995 = vpack.c.bf16 %v991, %v991
        %v996 = vpack.c.bf16 %v992, %v992
        %v997 = vpack.c.bf16 %v993, %v993
        %vm998 = vcmask 64512
        %v1000 = vsel %vm998, %v683, 0
        %v1003 = vsel %vm998, %v842, 0
        %1005 = vmatprep.subr.bf16.mxu0 0
        %1006 = vmatpush1.bf16.xpose.msra.mxu0 %v1003
        %1007 = vmatprep.subr.bf16.mxu0 0
        %1008 = vmatpush1.bf16.xpose.msra.mxu0 0
        %1009 = vmatprep.subr.bf16.mxu0 0
        %1010 = vmatpush1.bf16.xpose.msra.mxu0 0
        %1011 = vmatprep.subr.bf16.mxu0 0
        %1012 = vmatpush1.bf16.xpose.msra.mxu0 0
        %1013 = vmatprep.subr.bf16.mxu0 0
        %1014 = vmatpush1.bf16.xpose.msra.mxu0 0
        %1015 = vmatprep.subr.bf16.mxu0 0
        %1016 = vmatpush1.bf16.xpose.msra.mxu0 0
        %1017 = vmatprep.subr.bf16.mxu0 0
        %1018 = vmatpush1.bf16.xpose.msra.mxu0 0
        %1019 = vmatprep.subr.bf16.mxu0 0
        %1020 = vmatpush1.bf16.xpose.msra.mxu0 0
        %1021 = vmatprep.subr.bf16.mxu0 0
        %1022 = vmatpush1.bf16.xpose.msra.mxu0 0
        %1023 = vmatprep.subr.bf16.mxu0 0
        %1024 = vmatpush1.bf16.xpose.msra.mxu0 0
        %1025 = vmatprep.subr.bf16.mxu0 0
        %1026 = vmatpush1.bf16.xpose.msra.mxu0 0
        %1027 = vmatprep.subr.bf16.mxu0 0
        %1028 = vmatpush1.bf16.xpose.msra.mxu0 0
        %1029 = vmatprep.subr.bf16.mxu0 0
        %1030 = vmatpush1.bf16.xpose.msra.mxu0 0
        %1031 = vmatprep.subr.bf16.mxu0 0
        %1032 = vmatpush1.bf16.xpose.msra.mxu0 0
        %1033 = vmatprep.subr.bf16.mxu0 0
        %1034 = vmatpush1.bf16.xpose.msra.mxu0 0
        %1035 = vmatprep.subr.bf16.mxu0 0
        %1036 = vmatpush1.bf16.xpose.msra.mxu0 0
        %1037 = vmatprep.mubr.bf16.mxu0 0
        %1038 = vmatmul.mubr.bf16.gmra.mrb[0].mxu0 %v1000
        %v1039 = vpop.f32.mrb[0].mxu0
        %v1040 = vadd.f32 0.0, %v1039
        %v1041 = vpop.f32.mrb[0].mxu0
        %v1042 = vpop.f32.mrb[0].mxu0
        %v1043 = vpop.f32.mrb[0].mxu0
        %1044 = vdwg.mxu0
        %v1046 = vsel %vm998, %v684, 0
        %v1049 = vsel %vm998, %v843, 0
        %1051 = vmatprep.subr.bf16.mxu0 0
        %1052 = vmatpush1.bf16.xpose.msra.mxu0 %v1049
        %1053 = vmatprep.subr.bf16.mxu0 0
        %1054 = vmatpush1.bf16.xpose.msra.mxu0 0
        %1055 = vmatprep.subr.bf16.mxu0 0
        %1056 = vmatpush1.bf16.xpose.msra.mxu0 0
        %1057 = vmatprep.subr.bf16.mxu0 0
        %1058 = vmatpush1.bf16.xpose.msra.mxu0 0
        %1059 = vmatprep.subr.bf16.mxu0 0
        %1060 = vmatpush1.bf16.xpose.msra.mxu0 0
        %1061 = vmatprep.subr.bf16.mxu0 0
        %1062 = vmatpush1.bf16.xpose.msra.mxu0 0
        %1063 = vmatprep.subr.bf16.mxu0 0
        %1064 = vmatpush1.bf16.xpose.msra.mxu0 0
        %1065 = vmatprep.subr.bf16.mxu0 0
        %1066 = vmatpush1.bf16.xpose.msra.mxu0 0
        %1067 = vmatprep.subr.bf16.mxu0 0
        %1068 = vmatpush1.bf16.xpose.msra.mxu0 0
        %1069 = vmatprep.subr.bf16.mxu0 0
        %1070 = vmatpush1.bf16.xpose.msra.mxu0 0
        %1071 = vmatprep.subr.bf16.mxu0 0
        %1072 = vmatpush1.bf16.xpose.msra.mxu0 0
        %1073 = vmatprep.subr.bf16.mxu0 0
        %1074 = vmatpush1.bf16.xpose.msra.mxu0 0
        %1075 = vmatprep.subr.bf16.mxu0 0
        %1076 = vmatpush1.bf16.xpose.msra.mxu0 0
        %1077 = vmatprep.subr.bf16.mxu0 0
        %1078 = vmatpush1.bf16.xpose.msra.mxu0 0
        %1079 = vmatprep.subr.bf16.mxu0 0
        %1080 = vmatpush1.bf16.xpose.msra.mxu0 0
        %1081 = vmatprep.subr.bf16.mxu0 0
        %1082 = vmatpush1.bf16.xpose.msra.mxu0 0
        %1083 = vmatprep.mubr.bf16.mxu0 0
        %1084 = vmatmul.mubr.bf16.gmra.mrb[0].mxu0 %v1046
        %v1085 = vpop.f32.mrb[0].mxu0
        %v1086 = vadd.f32 0.0, %v1085
        %v1087 = vpop.f32.mrb[0].mxu0
        %v1088 = vpop.f32.mrb[0].mxu0
        %v1089 = vpop.f32.mrb[0].mxu0
        %1090 = vdwg.mxu0
        %v1092 = vsel %vm998, %v685, 0
        %v1095 = vsel %vm998, %v844, 0
        %1097 = vmatprep.subr.bf16.mxu0 0
        %1098 = vmatpush1.bf16.xpose.msra.mxu0 %v1095
        %1099 = vmatprep.subr.bf16.mxu0 0
        %1100 = vmatpush1.bf16.xpose.msra.mxu0 0
        %1101 = vmatprep.subr.bf16.mxu0 0
        %1102 = vmatpush1.bf16.xpose.msra.mxu0 0
        %1103 = vmatprep.subr.bf16.mxu0 0
        %1104 = vmatpush1.bf16.xpose.msra.mxu0 0
        %1105 = vmatprep.subr.bf16.mxu0 0
        %1106 = vmatpush1.bf16.xpose.msra.mxu0 0
        %1107 = vmatprep.subr.bf16.mxu0 0
        %1108 = vmatpush1.bf16.xpose.msra.mxu0 0
        %1109 = vmatprep.subr.bf16.mxu0 0
        %1110 = vmatpush1.bf16.xpose.msra.mxu0 0
        %1111 = vmatprep.subr.bf16.mxu0 0
        %1112 = vmatpush1.bf16.xpose.msra.mxu0 0
        %1113 = vmatprep.subr.bf16.mxu0 0
        %1114 = vmatpush1.bf16.xpose.msra.mxu0 0
        %1115 = vmatprep.subr.bf16.mxu0 0
        %1116 = vmatpush1.bf16.xpose.msra.mxu0 0
        %1117 = vmatprep.subr.bf16.mxu0 0
        %1118 = vmatpush1.bf16.xpose.msra.mxu0 0
        %1119 = vmatprep.subr.bf16.mxu0 0
        %1120 = vmatpush1.bf16.xpose.msra.mxu0 0
        %1121 = vmatprep.subr.bf16.mxu0 0
        %1122 = vmatpush1.bf16.xpose.msra.mxu0 0
        %1123 = vmatprep.subr.bf16.mxu0 0
        %1124 = vmatpush1.bf16.xpose.msra.mxu0 0
        %1125 = vmatprep.subr.bf16.mxu0 0
        %1126 = vmatpush1.bf16.xpose.msra.mxu0 0
        %1127 = vmatprep.subr.bf16.mxu0 0
        %1128 = vmatpush1.bf16.xpose.msra.mxu0 0
        %1129 = vmatprep.mubr.bf16.mxu0 0
        %1130 = vmatmul.mubr.bf16.gmra.mrb[0].mxu0 %v1092
        %v1131 = vpop.f32.mrb[0].mxu0
        %v1132 = vadd.f32 0.0, %v1131
        %v1133 = vpop.f32.mrb[0].mxu0
        %v1134 = vpop.f32.mrb[0].mxu0
        %v1135 = vpop.f32.mrb[0].mxu0
        %1136 = vdwg.mxu0
        %v1138 = vsel %vm998, %v686, 0
        %v1141 = vsel %vm998, %v845, 0
        %1143 = vmatprep.subr.bf16.mxu0 0
        %1144 = vmatpush1.bf16.xpose.msra.mxu0 %v1141
        %1145 = vmatprep.subr.bf16.mxu0 0
        %1146 = vmatpush1.bf16.xpose.msra.mxu0 0
        %1147 = vmatprep.subr.bf16.mxu0 0
        %1148 = vmatpush1.bf16.xpose.msra.mxu0 0
        %1149 = vmatprep.subr.bf16.mxu0 0
        %1150 = vmatpush1.bf16.xpose.msra.mxu0 0
        %1151 = vmatprep.subr.bf16.mxu0 0
        %1152 = vmatpush1.bf16.xpose.msra.mxu0 0
        %1153 = vmatprep.subr.bf16.mxu0 0
        %1154 = vmatpush1.bf16.xpose.msra.mxu0 0
        %1155 = vmatprep.subr.bf16.mxu0 0
        %1156 = vmatpush1.bf16.xpose.msra.mxu0 0
        %1157 = vmatprep.subr.bf16.mxu0 0
        %1158 = vmatpush1.bf16.xpose.msra.mxu0 0
        %1159 = vmatprep.subr.bf16.mxu0 0
        %1160 = vmatpush1.bf16.xpose.msra.mxu0 0
        %1161 = vmatprep.subr.bf16.mxu0 0
        %1162 = vmatpush1.bf16.xpose.msra.mxu0 0
        %1163 = vmatprep.subr.bf16.mxu0 0
        %1164 = vmatpush1.bf16.xpose.msra.mxu0 0
        %1165 = vmatprep.subr.bf16.mxu0 0
        %1166 = vmatpush1.bf16.xpose.msra.mxu0 0
        %1167 = vmatprep.subr.bf16.mxu0 0
        %1168 = vmatpush1.bf16.xpose.msra.mxu0 0
        %1169 = vmatprep.subr.bf16.mxu0 0
        %1170 = vmatpush1.bf16.xpose.msra.mxu0 0
        %1171 = vmatprep.subr.bf16.mxu0 0
        %1172 = vmatpush1.bf16.xpose.msra.mxu0 0
        %1173 = vmatprep.subr.bf16.mxu0 0
        %1174 = vmatpush1.bf16.xpose.msra.mxu0 0
        %1175 = vmatprep.mubr.bf16.mxu0 0
        %1176 = vmatmul.mubr.bf16.gmra.mrb[0].mxu0 %v1138
        %v1177 = vpop.f32.mrb[0].mxu0
        %v1178 = vadd.f32 0.0, %v1177
        %v1179 = vpop.f32.mrb[0].mxu0
        %v1180 = vpop.f32.mrb[0].mxu0
        %v1181 = vpop.f32.mrb[0].mxu0
        %1182 = vdwg.mxu0
        %v1183 = vsel %vm998, %v1040, -inf
        %1184 = vmax.xlane.f32.xlu0 %v1183
        %v1185 = vpop.xlane.xlu0 %1184
        %v1186 = vsel %vm998, %v1086, -inf
        %1187 = vmax.xlane.f32.xlu0 %v1186
        %v1188 = vpop.xlane.xlu0 %1187
        %v1189 = vsel %vm998, %v1132, -inf
        %1190 = vmax.xlane.f32.xlu0 %v1189
        %v1191 = vpop.xlane.xlu0 %1190
        %v1192 = vsel %vm998, %v1178, -inf
        %1193 = vmax.xlane.f32.xlu0 %v1192
        %v1194 = vpop.xlane.xlu0 %1193
        %v1195 = vsub.f32 %v1040, %v1185
        %v1196 = vsub.f32 %v1086, %v1188
        %v1197 = vsub.f32 %v1132, %v1191
        %v1198 = vsub.f32 %v1178, %v1194
        %v1199 = vmul.f32 %v1195, 1.442695
        %v1200 = vpow.pop %v1199
        %v1201 = vmul.f32 %v1196, 1.442695
        %v1202 = vpow.pop %v1201
        %v1203 = vmul.f32 %v1197, 1.442695
        %v1204 = vpow.pop %v1203
        %v1205 = vmul.f32 %v1198, 1.442695
        %v1206 = vpow.pop %v1205
        %v1207 = vsel %vm998, %v1200, 0.0
        %1208 = vadd.xlane.f32.xlu0 %v1207
        %v1209 = vpop.xlane.xlu0 %1208
        %v1210 = vsel %vm998, %v1202, 0.0
        %1211 = vadd.xlane.f32.xlu0 %v1210
        %v1212 = vpop.xlane.xlu0 %1211
        %v1213 = vsel %vm998, %v1204, 0.0
        %1214 = vadd.xlane.f32.xlu0 %v1213
        %v1215 = vpop.xlane.xlu0 %1214
        %v1216 = vsel %vm998, %v1206, 0.0
        %1217 = vadd.xlane.f32.xlu0 %v1216
        %v1218 = vpop.xlane.xlu0 %1217
        %v1219 = vrcp.pop %v1209
        %v1220 = vrcp.pop %v1212
        %v1221 = vrcp.pop %v1215
        %v1222 = vrcp.pop %v1218
        %v1223 = vmul.f32 %v1200, %v1219
        %v1224 = vmul.f32 %v1202, %v1220
        %v1225 = vmul.f32 %v1204, %v1221
        %v1226 = vmul.f32 %v1206, %v1222
        %v1227 = vpack.c.bf16 %v1223, %v1223
        %v1228 = vpack.c.bf16 %v1224, %v1224
        %v1229 = vpack.c.bf16 %v1225, %v1225
        %v1230 = vpack.c.bf16 %v1226, %v1226
        %v1232 = vsel %vm998, %v1227, 0
        %vm1234 = vcmask 1043456
        %v1236 = vsel %vm1234, %v994, 0
        %1238 = vmatprep.subr.bf16.mxu0 0
        %1239 = vmatpush1.bf16.msra.mxu0 %v1236
        %1240 = vmatprep.subr.bf16.mxu0 0
        %1241 = vmatpush1.bf16.msra.mxu0 0
        %1242 = vmatprep.subr.bf16.mxu0 0
        %1243 = vmatpush1.bf16.msra.mxu0 0
        %1244 = vmatprep.subr.bf16.mxu0 0
        %1245 = vmatpush1.bf16.msra.mxu0 0
        %1246 = vmatprep.subr.bf16.mxu0 0
        %1247 = vmatpush1.bf16.msra.mxu0 0
        %1248 = vmatprep.subr.bf16.mxu0 0
        %1249 = vmatpush1.bf16.msra.mxu0 0
        %1250 = vmatprep.subr.bf16.mxu0 0
        %1251 = vmatpush1.bf16.msra.mxu0 0
        %1252 = vmatprep.subr.bf16.mxu0 0
        %1253 = vmatpush1.bf16.msra.mxu0 0
        %1254 = vmatprep.subr.bf16.mxu0 0
        %1255 = vmatpush1.bf16.msra.mxu0 0
        %1256 = vmatprep.subr.bf16.mxu0 0
        %1257 = vmatpush1.bf16.msra.mxu0 0
        %1258 = vmatprep.subr.bf16.mxu0 0
        %1259 = vmatpush1.bf16.msra.mxu0 0
        %1260 = vmatprep.subr.bf16.mxu0 0
        %1261 = vmatpush1.bf16.msra.mxu0 0
        %1262 = vmatprep.subr.bf16.mxu0 0
        %1263 = vmatpush1.bf16.msra.mxu0 0
        %1264 = vmatprep.subr.bf16.mxu0 0
        %1265 = vmatpush1.bf16.msra.mxu0 0
        %1266 = vmatprep.subr.bf16.mxu0 0
        %1267 = vmatpush1.bf16.msra.mxu0 0
        %1268 = vmatprep.subr.bf16.mxu0 0
        %1269 = vmatpush1.bf16.msra.mxu0 0
        %1270 = vmatprep.mubr.bf16.mxu0 0
        %1271 = vmatmul.mubr.bf16.gmra.mrb[0].mxu0 %v1232
        %v1272 = vpop.f32.mrb[0].mxu0
        %v1273 = vadd.f32 0.0, %v1272
        %v1274 = vpop.f32.mrb[0].mxu0
        %v1275 = vpop.f32.mrb[0].mxu0
        %v1276 = vpop.f32.mrb[0].mxu0
        %1277 = vdwg.mxu0
        %v1279 = vsel %vm998, %v1228, 0
        %v1282 = vsel %vm1234, %v995, 0
        %1284 = vmatprep.subr.bf16.mxu0 0
        %1285 = vmatpush1.bf16.msra.mxu0 %v1282
        %1286 = vmatprep.subr.bf16.mxu0 0
        %1287 = vmatpush1.bf16.msra.mxu0 0
        %1288 = vmatprep.subr.bf16.mxu0 0
        %1289 = vmatpush1.bf16.msra.mxu0 0
        %1290 = vmatprep.subr.bf16.mxu0 0
        %1291 = vmatpush1.bf16.msra.mxu0 0
        %1292 = vmatprep.subr.bf16.mxu0 0
        %1293 = vmatpush1.bf16.msra.mxu0 0
        %1294 = vmatprep.subr.bf16.mxu0 0
        %1295 = vmatpush1.bf16.msra.mxu0 0
        %1296 = vmatprep.subr.bf16.mxu0 0
        %1297 = vmatpush1.bf16.msra.mxu0 0
        %1298 = vmatprep.subr.bf16.mxu0 0
        %1299 = vmatpush1.bf16.msra.mxu0 0
        %1300 = vmatprep.subr.bf16.mxu0 0
        %1301 = vmatpush1.bf16.msra.mxu0 0
        %1302 = vmatprep.subr.bf16.mxu0 0
        %1303 = vmatpush1.bf16.msra.mxu0 0
        %1304 = vmatprep.subr.bf16.mxu0 0
        %1305 = vmatpush1.bf16.msra.mxu0 0
        %1306 = vmatprep.subr.bf16.mxu0 0
        %1307 = vmatpush1.bf16.msra.mxu0 0
        %1308 = vmatprep.subr.bf16.mxu0 0
        %1309 = vmatpush1.bf16.msra.mxu0 0
        %1310 = vmatprep.subr.bf16.mxu0 0
        %1311 = vmatpush1.bf16.msra.mxu0 0
        %1312 = vmatprep.subr.bf16.mxu0 0
        %1313 = vmatpush1.bf16.msra.mxu0 0
        %1314 = vmatprep.subr.bf16.mxu0 0
        %1315 = vmatpush1.bf16.msra.mxu0 0
        %1316 = vmatprep.mubr.bf16.mxu0 0
        %1317 = vmatmul.mubr.bf16.gmra.mrb[0].mxu0 %v1279
        %v1318 = vpop.f32.mrb[0].mxu0
        %v1319 = vadd.f32 0.0, %v1318
        %v1320 = vpop.f32.mrb[0].mxu0
        %v1321 = vpop.f32.mrb[0].mxu0
        %v1322 = vpop.f32.mrb[0].mxu0
        %1323 = vdwg.mxu0
        %v1325 = vsel %vm998, %v1229, 0
        %v1328 = vsel %vm1234, %v996, 0
        %1330 = vmatprep.subr.bf16.mxu0 0
        %1331 = vmatpush1.bf16.msra.mxu0 %v1328
        %1332 = vmatprep.subr.bf16.mxu0 0
        %1333 = vmatpush1.bf16.msra.mxu0 0
        %1334 = vmatprep.subr.bf16.mxu0 0
        %1335 = vmatpush1.bf16.msra.mxu0 0
        %1336 = vmatprep.subr.bf16.mxu0 0
        %1337 = vmatpush1.bf16.msra.mxu0 0
        %1338 = vmatprep.subr.bf16.mxu0 0
        %1339 = vmatpush1.bf16.msra.mxu0 0
        %1340 = vmatprep.subr.bf16.mxu0 0
        %1341 = vmatpush1.bf16.msra.mxu0 0
        %1342 = vmatprep.subr.bf16.mxu0 0
        %1343 = vmatpush1.bf16.msra.mxu0 0
        %1344 = vmatprep.subr.bf16.mxu0 0
        %1345 = vmatpush1.bf16.msra.mxu0 0
        %1346 = vmatprep.subr.bf16.mxu0 0
        %1347 = vmatpush1.bf16.msra.mxu0 0
        %1348 = vmatprep.subr.bf16.mxu0 0
        %1349 = vmatpush1.bf16.msra.mxu0 0
        %1350 = vmatprep.subr.bf16.mxu0 0
        %1351 = vmatpush1.bf16.msra.mxu0 0
        %1352 = vmatprep.subr.bf16.mxu0 0
        %1353 = vmatpush1.bf16.msra.mxu0 0
        %1354 = vmatprep.subr.bf16.mxu0 0
        %1355 = vmatpush1.bf16.msra.mxu0 0
        %1356 = vmatprep.subr.bf16.mxu0 0
        %1357 = vmatpush1.bf16.msra.mxu0 0
        %1358 = vmatprep.subr.bf16.mxu0 0
        %1359 = vmatpush1.bf16.msra.mxu0 0
        %1360 = vmatprep.subr.bf16.mxu0 0
        %1361 = vmatpush1.bf16.msra.mxu0 0
        %1362 = vmatprep.mubr.bf16.mxu0 0
        %1363 = vmatmul.mubr.bf16.gmra.mrb[0].mxu0 %v1325
        %v1364 = vpop.f32.mrb[0].mxu0
        %v1365 = vadd.f32 0.0, %v1364
        %v1366 = vpop.f32.mrb[0].mxu0
        %v1367 = vpop.f32.mrb[0].mxu0
        %v1368 = vpop.f32.mrb[0].mxu0
        %1369 = vdwg.mxu0
        %v1371 = vsel %vm998, %v1230, 0
        %v1374 = vsel %vm1234, %v997, 0
        %1376 = vmatprep.subr.bf16.mxu0 0
        %1377 = vmatpush1.bf16.msra.mxu0 %v1374
        %1378 = vmatprep.subr.bf16.mxu0 0
        %1379 = vmatpush1.bf16.msra.mxu0 0
        %1380 = vmatprep.subr.bf16.mxu0 0
        %1381 = vmatpush1.bf16.msra.mxu0 0
        %1382 = vmatprep.subr.bf16.mxu0 0
        %1383 = vmatpush1.bf16.msra.mxu0 0
        %1384 = vmatprep.subr.bf16.mxu0 0
        %1385 = vmatpush1.bf16.msra.mxu0 0
        %1386 = vmatprep.subr.bf16.mxu0 0
        %1387 = vmatpush1.bf16.msra.mxu0 0
        %1388 = vmatprep.subr.bf16.mxu0 0
        %1389 = vmatpush1.bf16.msra.mxu0 0
        %1390 = vmatprep.subr.bf16.mxu0 0
        %1391 = vmatpush1.bf16.msra.mxu0 0
        %1392 = vmatprep.subr.bf16.mxu0 0
        %1393 = vmatpush1.bf16.msra.mxu0 0
        %1394 = vmatprep.subr.bf16.mxu0 0
        %1395 = vmatpush1.bf16.msra.mxu0 0
        %1396 = vmatprep.subr.bf16.mxu0 0
        %1397 = vmatpush1.bf16.msra.mxu0 0
        %1398 = vmatprep.subr.bf16.mxu0 0
        %1399 = vmatpush1.bf16.msra.mxu0 0
        %1400 = vmatprep.subr.bf16.mxu0 0
        %1401 = vmatpush1.bf16.msra.mxu0 0
        %1402 = vmatprep.subr.bf16.mxu0 0
        %1403 = vmatpush1.bf16.msra.mxu0 0
        %1404 = vmatprep.subr.bf16.mxu0 0
        %1405 = vmatpush1.bf16.msra.mxu0 0
        %1406 = vmatprep.subr.bf16.mxu0 0
        %1407 = vmatpush1.bf16.msra.mxu0 0
        %1408 = vmatprep.mubr.bf16.mxu0 0
        %1409 = vmatmul.mubr.bf16.gmra.mrb[0].mxu0 %v1371
        %v1410 = vpop.f32.mrb[0].mxu0
        %v1411 = vadd.f32 0.0, %v1410
        %v1412 = vpop.f32.mrb[0].mxu0
        %v1413 = vpop.f32.mrb[0].mxu0
        %v1414 = vpop.f32.mrb[0].mxu0
        %1415 = vdwg.mxu0
        %v1416 = vcombine.low %v1273, %v1365
        %v1417 = vcombine.high %v1273, %v1365
        %v1419 = vunpack.c.l.s4 1983009808
        %v1420 = vunpack.c.0.s8 %v1419
        %v1421 = vlaneseq
        %v1422 = vshrl.u32 %v1421, 7
        %v1423 = vsub.s32 %v1420, %v1422
        %v1424 = vrot.slane %v1416, %v1423
        %v1426 = vunpack.c.l.s4 1983009808
        %v1427 = vunpack.c.0.s8 %v1426
        %v1428 = vlaneseq
        %v1429 = vshrl.u32 %v1428, 7
        %v1430 = vsub.s32 %v1427, %v1429
        %v1431 = vrot.slane %v1417, %v1430
        %v1432 = vcombine.low %v1319, %v1411
        %v1433 = vcombine.high %v1319, %v1411
        %v1435 = vunpack.c.l.s4 1983009808
        %v1436 = vunpack.c.0.s8 %v1435
        %v1437 = vlaneseq
        %v1438 = vshrl.u32 %v1437, 7
        %v1439 = vsub.s32 %v1436, %v1438
        %v1440 = vrot.slane %v1432, %v1439
        %v1442 = vunpack.c.l.s4 1983009808
        %v1443 = vunpack.c.0.s8 %v1442
        %v1444 = vlaneseq
        %v1445 = vshrl.u32 %v1444, 7
        %v1446 = vsub.s32 %v1443, %v1445
        %v1447 = vrot.slane %v1433, %v1446
        %v1448 = vcombine.low %v1424, %v1440
        %v1449 = vcombine.high %v1424, %v1440
        %v1451 = vunpack.c.l.s4 1934713408
        %v1452 = vunpack.c.0.s8 %v1451
        %v1453 = vlaneseq
        %v1454 = vshrl.u32 %v1453, 7
        %v1455 = vsub.s32 %v1452, %v1454
        %v1456 = vrot.slane %v1448, %v1455
        %v1458 = vunpack.c.l.s4 1934713408
        %v1459 = vunpack.c.0.s8 %v1458
        %v1460 = vlaneseq
        %v1461 = vshrl.u32 %v1460, 7
        %v1462 = vsub.s32 %v1459, %v1461
        %v1463 = vrot.slane %v1449, %v1462
        %v1464 = vcombine.low %v1431, %v1447
        %v1465 = vcombine.high %v1431, %v1447
        %v1467 = vunpack.c.l.s4 1934713408
        %v1468 = vunpack.c.0.s8 %v1467
        %v1469 = vlaneseq
        %v1470 = vshrl.u32 %v1469, 7
        %v1471 = vsub.s32 %v1468, %v1470
        %v1472 = vrot.slane %v1464, %v1471
        %v1474 = vunpack.c.l.s4 1934713408
        %v1475 = vunpack.c.0.s8 %v1474
        %v1476 = vlaneseq
        %v1477 = vshrl.u32 %v1476, 7
        %v1478 = vsub.s32 %v1475, %v1477
        %v1479 = vrot.slane %v1465, %v1478
        %v1480 = vcombine.high %v1456, 0.0
        %v1481 = vcombine.high %v1463, 0.0
        %v1482 = vcombine.high %v1472, 0.0
        %v1483 = vcombine.high %v1479, 0.0
        %v1484 = vcombine.low %v1456, %v1463
        %v1486 = vunpack.c.l.s4 1983009808
        %v1487 = vunpack.c.0.s8 %v1486
        %v1488 = vlaneseq
        %v1489 = vshrl.u32 %v1488, 7
        %v1490 = vsub.s32 %v1487, %v1489
        %v1491 = vrot.slane %v1484, %v1490
        %v1492 = vcombine.low %v1480, %v1481
        %v1494 = vunpack.c.l.s4 1983009808
        %v1495 = vunpack.c.0.s8 %v1494
        %v1496 = vlaneseq
        %v1497 = vshrl.u32 %v1496, 7
        %v1498 = vsub.s32 %v1495, %v1497
        %v1499 = vrot.slane %v1492, %v1498
        %v1500 = vcombine.low %v1472, %v1479
        %v1502 = vunpack.c.l.s4 1983009808
        %v1503 = vunpack.c.0.s8 %v1502
        %v1504 = vlaneseq
        %v1505 = vshrl.u32 %v1504, 7
        %v1506 = vsub.s32 %v1503, %v1505
        %v1507 = vrot.slane %v1500, %v1506
        %v1508 = vcombine.low %v1482, %v1483
        %v1510 = vunpack.c.l.s4 1983009808
        %v1511 = vunpack.c.0.s8 %v1510
        %v1512 = vlaneseq
        %v1513 = vshrl.u32 %v1512, 7
        %v1514 = vsub.s32 %v1511, %v1513
        %v1515 = vrot.slane %v1508, %v1514
        %v1516 = vcombine.low %v1491, %v1499
        %v1517 = vcombine.high %v1491, %v1499
        %v1519 = vunpack.c.l.s4 1934713408
        %v1520 = vunpack.c.0.s8 %v1519
        %v1521 = vlaneseq
        %v1522 = vshrl.u32 %v1521, 7
        %v1523 = vsub.s32 %v1520, %v1522
        %v1524 = vrot.slane %v1516, %v1523
        %v1526 = vunpack.c.l.s4 1934713408
        %v1527 = vunpack.c.0.s8 %v1526
        %v1528 = vlaneseq
        %v1529 = vshrl.u32 %v1528, 7
        %v1530 = vsub.s32 %v1527, %v1529
        %v1531 = vrot.slane %v1517, %v1530
        %v1532 = vcombine.low %v1507, %v1515
        %v1533 = vcombine.high %v1507, %v1515
        %v1535 = vunpack.c.l.s4 1934713408
        %v1536 = vunpack.c.0.s8 %v1535
        %v1537 = vlaneseq
        %v1538 = vshrl.u32 %v1537, 7
        %v1539 = vsub.s32 %v1536, %v1538
        %v1540 = vrot.slane %v1532, %v1539
        %v1542 = vunpack.c.l.s4 1934713408
        %v1543 = vunpack.c.0.s8 %v1542
        %v1544 = vlaneseq
        %v1545 = vshrl.u32 %v1544, 7
        %v1546 = vsub.s32 %v1543, %v1545
        %v1547 = vrot.slane %v1533, %v1546
        %v1548 = vcombine.low %v1524, %v1540
        %v1549 = vcombine.high %v1524, %v1540
        %v1550 = vcombine.low %v1531, %v1547
        %v1551 = vcombine.high %v1531, %v1547
        %1553 = vrot.lane.b32.xlu0 %v1549, 8
        %v1554 = vpop.permute.xlu0 %1553
        %1557 = vrot.lane.b32.xlu0 %v1550, 16
        %v1558 = vpop.permute.xlu0 %1557
        %1561 = vrot.lane.b32.xlu0 %v1551, 24
        %v1562 = vpop.permute.xlu0 %1561
        %v1564 = vsel %vm998, %v1548, %v1554
        %vm1565 = vcmask 130048
        %v1566 = vsel %vm1565, %v1564, %v1558
        %vm1567 = vcmask 195584
        %v1568 = vsel %vm1567, %v1566, %v1562
        %v1569 = vpack.c.bf16 %v1568, %v1568
        %v1570 = vld [vmem:[%s5] sm:$0xf]
        %v1571 = vld [vmem:[%s5 + $0x4] sm:$0xf]
        %v1572 = vld [vmem:[%s5 + $0x8] sm:$0xf]
        %v1573 = vld [vmem:[%s5 + $0xc] sm:$0xf]
        %v1574 = vld [vmem:[%s6] sm:$0x1]
        %v1576 = vlaneseq
        %v1577 = vshrl.u32 %v1576, 7
        %v1578 = vsub.s32 0, %v1577
        %v1579 = vrot.slane %v1574, %v1578
        %v1585 = vunpack.c.l.b16 %v1570
        %v1586 = vunpack.c.l.b16 %v1571
        %v1587 = vunpack.c.l.b16 %v1572
        %v1588 = vunpack.c.l.b16 %v1573
        %v1589 = vpack.c.b16 %v1586, %v1585
        %v1590 = vpack.c.b16 %v1588, %v1587
        %v1594 = vsel %vm440, %v1569, 0
        %1596 = vmatprep.subr.bf16.mxu0 0
        %1597 = vmatpush1.bf16.msra.mxu0 %v1589
        %1598 = vmatprep.subr.bf16.mxu0 0
        %1599 = vmatpush1.bf16.msra.mxu0 %v1590
        %1600 = vmatprep.subr.bf16.mxu0 0
        %1601 = vmatpush1.bf16.msra.mxu0 0
        %1602 = vmatprep.subr.bf16.mxu0 0
        %1603 = vmatpush1.bf16.msra.mxu0 0
        %1604 = vmatprep.subr.bf16.mxu0 0
        %1605 = vmatpush1.bf16.msra.mxu0 0
        %1606 = vmatprep.subr.bf16.mxu0 0
        %1607 = vmatpush1.bf16.msra.mxu0 0
        %1608 = vmatprep.subr.bf16.mxu0 0
        %1609 = vmatpush1.bf16.msra.mxu0 0
        %1610 = vmatprep.subr.bf16.mxu0 0
        %1611 = vmatpush1.bf16.msra.mxu0 0
        %1612 = vmatprep.subr.bf16.mxu0 0
        %1613 = vmatpush1.bf16.msra.mxu0 0
        %1614 = vmatprep.subr.bf16.mxu0 0
        %1615 = vmatpush1.bf16.msra.mxu0 0
        %1616 = vmatprep.subr.bf16.mxu0 0
        %1617 = vmatpush1.bf16.msra.mxu0 0
        %1618 = vmatprep.subr.bf16.mxu0 0
        %1619 = vmatpush1.bf16.msra.mxu0 0
        %1620 = vmatprep.subr.bf16.mxu0 0
        %1621 = vmatpush1.bf16.msra.mxu0 0
        %1622 = vmatprep.subr.bf16.mxu0 0
        %1623 = vmatpush1.bf16.msra.mxu0 0
        %1624 = vmatprep.subr.bf16.mxu0 0
        %1625 = vmatpush1.bf16.msra.mxu0 0
        %1626 = vmatprep.subr.bf16.mxu0 0
        %1627 = vmatpush1.bf16.msra.mxu0 0
        %1628 = vmatprep.mubr.bf16.mxu0 0
        %1629 = vmatmul.mubr.bf16.gmra.mrb[0].mxu0 %v1594
        %v1630 = vpop.f32.mrb[0].mxu0
        %v1631 = vadd.f32 %v1579, %v1630
        %v1632 = vpop.f32.mrb[0].mxu0
        %v1633 = vpop.f32.mrb[0].mxu0
        %v1634 = vpop.f32.mrb[0].mxu0
        %1635 = vdwg.mxu0
        %v1636 = vadd.f32 %v437, %v1631
        %v1637 = vld [vmem:[%s7] sm:$0x1]
        %v1638 = vld [vmem:[%s8] sm:$0x1]
        %v1639 = vsel %vm440, %v1636, 0.0
        %1640 = vadd.xlane.f32.xlu0 %v1639
        %v1641 = vpop.xlane.xlu0 %1640
        %v1642 = vmul.f32 %v1641, %v444
        %v1643 = vsub.f32 %v1636, %v1642
        %v1644 = vmul.f32 %v1643, %v1643
        %v1645 = vsel %vm440, %v1644, 0.0
        %1646 = vadd.xlane.f32.xlu0 %v1645
        %v1647 = vpop.xlane.xlu0 %1646
        %v1648 = vmul.f32 %v1647, %v444
        %v1649 = vadd.f32 %v1648, 1e-05
        %v1650 = vrsqrt.pop %v1649
        %v1651 = vmul.f32 %v1643, %v1650
        %v1653 = vlaneseq
        %v1654 = vshrl.u32 %v1653, 7
        %v1655 = vsub.s32 0, %v1654
        %v1656 = vrot.slane %v1637, %v1655
        %v1658 = vmul.f32 %v1651, %v1656
        %v1660 = vlaneseq
        %v1661 = vshrl.u32 %v1660, 7
        %v1662 = vsub.s32 0, %v1661
        %v1663 = vrot.slane %v1638, %v1662
        %v1665 = vadd.f32 %v1658, %v1663
        %v1666 = vpack.c.bf16 %v1665, %v1665
        %v1667 = vld [vmem:[%s9] sm:$0xf]
        %v1668 = vld [vmem:[%s9 + $0x4] sm:$0xf]
        %v1669 = vld [vmem:[%s9 + $0x8] sm:$0xf]
        %v1670 = vld [vmem:[%s9 + $0xc] sm:$0xf]
        %v1671 = vld [vmem:[%s10] sm:$0x1]
        %v1673 = vlaneseq
        %v1674 = vshrl.u32 %v1673, 7
        %v1675 = vsub.s32 0, %v1674
        %v1676 = vrot.slane %v1671, %v1675
        %v1682 = vunpack.c.l.b16 %v1667
        %v1683 = vunpack.c.l.b16 %v1668
        %v1684 = vunpack.c.l.b16 %v1669
        %v1685 = vunpack.c.l.b16 %v1670
        %v1686 = vpack.c.b16 %v1683, %v1682
        %v1687 = vpack.c.b16 %v1685, %v1684
        %v1691 = vsel %vm440, %v1666, 0
        %1693 = vmatprep.subr.bf16.mxu0 0
        %1694 = vmatpush1.bf16.msra.mxu0 %v1686
        %1695 = vmatprep.subr.bf16.mxu0 0
        %1696 = vmatpush1.bf16.msra.mxu0 %v1687
        %1697 = vmatprep.subr.bf16.mxu0 0
        %1698 = vmatpush1.bf16.msra.mxu0 0
        %1699 = vmatprep.subr.bf16.mxu0 0
        %1700 = vmatpush1.bf16.msra.mxu0 0
        %1701 = vmatprep.subr.bf16.mxu0 0
        %1702 = vmatpush1.bf16.msra.mxu0 0
        %1703 = vmatprep.subr.bf16.mxu0 0
        %1704 = vmatpush1.bf16.msra.mxu0 0
        %1705 = vmatprep.subr.bf16.mxu0 0
        %1706 = vmatpush1.bf16.msra.mxu0 0
        %1707 = vmatprep.subr.bf16.mxu0 0
        %1708 = vmatpush1.bf16.msra.mxu0 0
        %1709 = vmatprep.subr.bf16.mxu0 0
        %1710 = vmatpush1.bf16.msra.mxu0 0
        %1711 = vmatprep.subr.bf16.mxu0 0
        %1712 = vmatpush1.bf16.msra.mxu0 0
        %1713 = vmatprep.subr.bf16.mxu0 0
        %1714 = vmatpush1.bf16.msra.mxu0 0
        %1715 = vmatprep.subr.bf16.mxu0 0
        %1716 = vmatpush1.bf16.msra.mxu0 0
        %1717 = vmatprep.subr.bf16.mxu0 0
        %1718 = vmatpush1.bf16.msra.mxu0 0
        %1719 = vmatprep.subr.bf16.mxu0 0
        %1720 = vmatpush1.bf16.msra.mxu0 0
        %1721 = vmatprep.subr.bf16.mxu0 0
        %1722 = vmatpush1.bf16.msra.mxu0 0
        %1723 = vmatprep.subr.bf16.mxu0 0
        %1724 = vmatpush1.bf16.msra.mxu0 0
        %1725 = vmatprep.mubr.bf16.mxu0 0
        %1726 = vmatmul.mubr.bf16.gmra.mrb[0].mxu0 %v1691
        %v1727 = vpop.f32.mrb[0].mxu0
        %v1728 = vadd.f32 %v1676, %v1727
        %v1729 = vpop.f32.mrb[0].mxu0
        %v1730 = vpop.f32.mrb[0].mxu0
        %v1731 = vpop.f32.mrb[0].mxu0
        %1732 = vdwg.mxu0
        %v1733 = vmul.f32 %v1728, 1.702
        %v1734 = vxor.u32 %v1733, 2147483648
        %v1735 = vmul.f32 %v1734, 1.442695
        %v1736 = vpow.pop %v1735
        %v1737 = vadd.f32 %v1736, 1.0
        %v1738 = vrcp.pop %v1737
        %v1739 = vmul.f32 1.0, %v1738
        %v1740 = vmul.f32 %v1728, %v1739
        %v1741 = vpack.c.bf16 %v1740, %v1740
        %v1742 = vld [vmem:[%s11] sm:$0xf]
        %v1743 = vld [vmem:[%s11 + $0x4] sm:$0xf]
        %v1744 = vld [vmem:[%s11 + $0x8] sm:$0xf]
        %v1745 = vld [vmem:[%s11 + $0xc] sm:$0xf]
        %v1746 = vld [vmem:[%s11 + $0x10] sm:$0xf]
        %v1747 = vld [vmem:[%s11 + $0x14] sm:$0xf]
        %v1748 = vld [vmem:[%s11 + $0x18] sm:$0xf]
        %v1749 = vld [vmem:[%s11 + $0x1c] sm:$0xf]
        %v1750 = vld [vmem:[%s11 + $0x20] sm:$0xf]
        %v1751 = vld [vmem:[%s11 + $0x24] sm:$0xf]
        %v1752 = vld [vmem:[%s11 + $0x28] sm:$0xf]
        %v1753 = vld [vmem:[%s11 + $0x2c] sm:$0xf]
        %v1754 = vld [vmem:[%s11 + $0x30] sm:$0xf]
        %v1755 = vld [vmem:[%s11 + $0x34] sm:$0xf]
        %v1756 = vld [vmem:[%s11 + $0x38] sm:$0xf]
        %v1757 = vld [vmem:[%s11 + $0x3c] sm:$0xf]
        %v1758 = vld [vmem:[%s12] sm:$0x1]
        %v1760 = vlaneseq
        %v1761 = vshrl.u32 %v1760, 7
        %v1762 = vsub.s32 0, %v1761
        %v1763 = vrot.slane %v1758, %v1762
        %v1781 = vunpack.c.l.b16 %v1742
        %v1782 = vunpack.c.l.b16 %v1743
        %v1783 = vunpack.c.l.b16 %v1744
        %v1784 = vunpack.c.l.b16 %v1745
        %v1785 = vunpack.c.l.b16 %v1746
        %v1786 = vunpack.c.l.b16 %v1747
        %v1787 = vunpack.c.l.b16 %v1748
        %v1788 = vunpack.c.l.b16 %v1749
        %v1789 = vunpack.c.l.b16 %v1750
        %v1790 = vunpack.c.l.b16 %v1751
        %v1791 = vunpack.c.l.b16 %v1752
        %v1792 = vunpack.c.l.b16 %v1753
        %v1793 = vunpack.c.l.b16 %v1754
        %v1794 = vunpack.c.l.b16 %v1755
        %v1795 = vunpack.c.l.b16 %v1756
        %v1796 = vunpack.c.l.b16 %v1757
        %v1797 = vpack.c.b16 %v1782, %v1781
        %v1798 = vpack.c.b16 %v1784, %v1783
        %v1799 = vpack.c.b16 %v1786, %v1785
        %v1800 = vpack.c.b16 %v1788, %v1787
        %v1801 = vpack.c.b16 %v1790, %v1789
        %v1802 = vpack.c.b16 %v1792, %v1791
        %v1803 = vpack.c.b16 %v1794, %v1793
        %v1804 = vpack.c.b16 %v1796, %v1795
        %1813 = vmatprep.subr.bf16.mxu0 0
        %1814 = vmatpush1.bf16.msra.mxu0 %v1797
        %1815 = vmatprep.subr.bf16.mxu0 0
        %1816 = vmatpush1.bf16.msra.mxu0 %v1798
        %1817 = vmatprep.subr.bf16.mxu0 0
        %1818 = vmatpush1.bf16.msra.mxu0 %v1799
        %1819 = vmatprep.subr.bf16.mxu0 0
        %1820 = vmatpush1.bf16.msra.mxu0 %v1800
        %1821 = vmatprep.subr.bf16.mxu0 0
        %1822 = vmatpush1.bf16.msra.mxu0 %v1801
        %1823 = vmatprep.subr.bf16.mxu0 0
        %1824 = vmatpush1.bf16.msra.mxu0 %v1802
        %1825 = vmatprep.subr.bf16.mxu0 0
        %1826 = vmatpush1.bf16.msra.mxu0 %v1803
        %1827 = vmatprep.subr.bf16.mxu0 0
        %1828 = vmatpush1.bf16.msra.mxu0 %v1804
        %1829 = vmatprep.subr.bf16.mxu0 0
        %1830 = vmatpush1.bf16.msra.mxu0 0
        %1831 = vmatprep.subr.bf16.mxu0 0
        %1832 = vmatpush1.bf16.msra.mxu0 0
        %1833 = vmatprep.subr.bf16.mxu0 0
        %1834 = vmatpush1.bf16.msra.mxu0 0
        %1835 = vmatprep.subr.bf16.mxu0 0
        %1836 = vmatpush1.bf16.msra.mxu0 0
        %1837 = vmatprep.subr.bf16.mxu0 0
        %1838 = vmatpush1.bf16.msra.mxu0 0
        %1839 = vmatprep.subr.bf16.mxu0 0
        %1840 = vmatpush1.bf16.msra.mxu0 0
        %1841 = vmatprep.subr.bf16.mxu0 0
        %1842 = vmatpush1.bf16.msra.mxu0 0
        %1843 = vmatprep.subr.bf16.mxu0 0
        %1844 = vmatpush1.bf16.msra.mxu0 0
        %1845 = vmatprep.mubr.bf16.mxu0 0
        %1846 = vmatmul.mubr.bf16.gmra.mrb[0].mxu0 %v1741
        %v1847 = vpop.f32.mrb[0].mxu0
        %v1848 = vadd.f32 %v1763, %v1847
        %v1849 = vpop.f32.mrb[0].mxu0
        %v1850 = vpop.f32.mrb[0].mxu0
        %v1851 = vpop.f32.mrb[0].mxu0
        %1852 = vdwg.mxu0
        %v1853 = vadd.f32 %v1636, %v1848
        %1854 = vst.msk [vmem:[%s431] sm:$0xff] %vm440, %v1853
        %s1855 = sand.u32 %s313, 1
        %s1856 = scalar_lea.sflag [#allocation3], %s1855
        %s1857 = sand.u32 %s313, 1
        %s1858 = smul.addr %s1857, 8
        %s1859 = scalar_lea.vmem [#allocation2], %s1858
        // Predicated region
        $region73: #{tpu_custom_call.1} parent=71 // pred_check
          %p1860 = pneg %p323
        $region74: #{tpu_custom_call.1} parent=71 // pred_check_branch
          %1862 = sbr.rel (%p1860) target = $region76
        $region75: #{tpu_custom_call.1} parent=71 // pred_region
          %s1864 = ssub.s32 128, 128
          %1865 = vsyncadd %s1856, %s1864
          %s1866 = smul.addr %s27, 128
          %s1867 = scalar_lea.hbm %s13, %s1866
          %s1869 = sshll.u32 %s1859, 4
          %s1870 = int_to_ptr.vmem [resolvable:$true] %s1869
          %1872 = dma.vmem_to_hbm [thread:$0]  %s1870, 128, %s1867, %s1856
        $region76: #{tpu_custom_call.1} parent=71 // pred_fallthru
          _
      $region72: #{tpu_custom_call.1} parent=5 // pred_fallthru
        _
      %p1873 = scmp.le.s32.totalorder 2, %s22
      // Predicated region
      $region77: #{tpu_custom_call.1} parent=5 // pred_check
        %p1874 = pneg %p1873
      $region78: #{tpu_custom_call.1} parent=5 // pred_check_branch
        %1876 = sbr.rel (%p1874) target = $region80
      $region79: #{tpu_custom_call.1} parent=5 // pred_region
        %s1877 = ssub.s32 %s22, 2
        // Predicated region
        $region81: #{tpu_custom_call.1} parent=79 // pred_check
          %p1878 = pneg %p329
        $region82: #{tpu_custom_call.1} parent=79 // pred_check_branch
          %1880 = sbr.rel (%p1878) target = $region84
        $region83: #{tpu_custom_call.1} parent=79 // pred_region
          %s1881 = sand.u32 %s314, 1
          %s1882 = scalar_lea.sflag [#allocation3], %s1881
          %s1883 = sand.u32 %s314, 1
          %s1884 = smul.addr %s1883, 8
          %s1885 = scalar_lea.vmem [#allocation2], %s1884
          %1886 = dma.done %s1882, 128
        $region84: #{tpu_custom_call.1} parent=79 // pred_fallthru
          _
      $region80: #{tpu_custom_call.1} parent=5 // pred_fallthru
        _
    $region6: #{tpu_custom_call.1} parent=1 // loop_footer
      %s26 = sadd.s32 1, %s22
    $region7: #{tpu_custom_call.1} parent=1 // loop_footer_branch
      %21 = sbr.rel target = $region3
    $region8: #{tpu_custom_call.1} parent=1 // loop_exit
      _
    %1887 = vsyncpa [#allocation3], 1
    %s1888 = scalar_lea.sflag [#allocation3], 1
    %1889 = vsyncpa %s1888, 1

</llo_original>
